<compile_context>
chip_gen: v7x
topology: tpu7x:2x2x1
jax: 0.10.0
libtpu: 0.0.40
codegen_flags: <defaults>
</compile_context>

<pallas_src>
import functools

import jax
import jax.numpy as jnp
from jax.experimental import pallas as pl
from jax.experimental.pallas import tpu as pltpu

_MB = 1024 * 1024


def _round_up(x, m):
    return ((x + m - 1) // m) * m


def _vmem_budgets():
    """Generation-aware (working-set budget, scoped-vmem limit), in bytes."""
    try:
        cap = int(pltpu.get_tpu_info().vmem_capacity_bytes)
    except Exception:
        cap = 64 * _MB  # conservative fallback (v7x-sized VMEM per TensorCore)
    # Keep the double-buffered working set at ~75% of physical VMEM with
    # >= 16 MiB headroom: ~48 MiB of 64 on v7x, ~96 MiB of 128 on v5e/v6e.
    ws = max(16 * _MB, min(int(0.75 * cap), cap - 16 * _MB))
    limit = max(32 * _MB, min(cap - 4 * _MB, ws + 16 * _MB))
    return ws, limit


# ----------------------------------------------------------------------------
# Lane-dense kernel: sigma streamed as (TB, F*F) with F*F a multiple of 128.
# ----------------------------------------------------------------------------
def _vdp_softmax_kernel_flat(mu_ref, sig_ref, e_row_ref, e_col_ref,
                             r_row_ref, r_col_ref, mu_out_ref, sig_out_ref, *,
                             assume_symmetric):
    # mu_ref: (TB, F)   sig_ref: (TB, F*F) with lane index l = i*F + j
    mu = mu_ref[...].astype(jnp.float32)
    m = jnp.max(mu, axis=-1, keepdims=True)
    e = jnp.exp(mu - m)
    p = e / jnp.sum(e, axis=-1, keepdims=True)                      # (TB, F)
    mu_out_ref[...] = p.astype(mu_out_ref.dtype)

    # f32 working copy (charged to the VMEM budget in _pick_tb_flat).
    sig = sig_ref[...].astype(jnp.float32)                          # (TB, FF)
    e_row = e_row_ref[...]                                          # (F, FF)
    e_col = e_col_ref[...]                                          # (F, FF)

    # Lane-dense broadcasts p_i / p_j over the flattened (i, j) lane axis,
    # done as tiny selector matmuls on the otherwise-idle MXU.
    p_row = jnp.dot(p, e_row, preferred_element_type=jnp.float32)   # p_{i(l)}
    p_col = jnp.dot(p, e_col, preferred_element_type=jnp.float32)   # p_{j(l)}

    # v_i = sum_j sigma_ij p_j ; w_j = sum_i p_i sigma_ij ; s = p^T sigma p
    v = jnp.dot(sig * p_col, r_row_ref[...],
                preferred_element_type=jnp.float32)                 # (TB, F)
    if assume_symmetric:
        w = v                                                       # sigma = sigma^T
    else:
        w = jnp.dot(sig * p_row, r_col_ref[...],
                    preferred_element_type=jnp.float32)             # (TB, F)
    s = jnp.sum(v * p, axis=-1, keepdims=True)                      # (TB, 1)

    # corr[b, i*F+j] = (v_i - s) + w_j   (the `+ s` is hoisted off the tile)
    corr = (jnp.dot(v - s, e_row, preferred_element_type=jnp.float32) +
            jnp.dot(w, e_col, preferred_element_type=jnp.float32))  # (TB, FF)

    out = (sig - corr) * (p_row * p_col)
    sig_out_ref[...] = out.astype(sig_out_ref.dtype)


# ----------------------------------------------------------------------------
# General (possibly lane-padded) kernel: sigma blocked as (TB, F, F).
# ----------------------------------------------------------------------------
def _vdp_softmax_kernel_padded(mu_ref, sigma_ref, mu_out_ref, sigma_out_ref, *,
                               assume_symmetric):
    # mu_ref: (TB, 1, F)   sigma_ref: (TB, F, F)
    mu = mu_ref[...].astype(jnp.float32)
    m = jnp.max(mu, axis=-1, keepdims=True)
    e = jnp.exp(mu - m)
    p = e / jnp.sum(e, axis=-1, keepdims=True)                      # (TB, 1, F)
    mu_out_ref[...] = p.astype(mu_out_ref.dtype)

    sigma = sigma_ref[...].astype(jnp.float32)                      # (TB, F, F)
    pc = p                                                          # p_j on lanes
    pr = jnp.swapaxes(p, -1, -2)                                    # p_i on sublanes

    v = jnp.sum(sigma * pc, axis=-1, keepdims=True)                 # (TB, F, 1)
    if assume_symmetric:
        w = jnp.swapaxes(v, -1, -2)                                 # w = v^T
    else:
        w = jnp.sum(sigma * pr, axis=-2, keepdims=True)             # (TB, 1, F)
    s = jnp.sum(v * pr, axis=-2, keepdims=True)                     # (TB, 1, 1)
    t = w - s                                                       # hoist `+ s`

    sigma_out_ref[...] = ((sigma - v - t) * pr * pc).astype(sigma_out_ref.dtype)


# ----------------------------------------------------------------------------
# Tile sizing (VMEM-accurate, generation aware).
# ----------------------------------------------------------------------------
def _pick_tb_flat(B, F, sig_isz, mu_isz, ws_budget):
    FF = F * F
    # 4 f32 selector constants, assume double-buffered by the pipeline.
    const_bytes = 2 * 4 * F * FF * 4
    # Per batch row: sigma in + out (double-buffered) + ~8 f32 full-tile
    # temporaries (f32 copy, p_row, p_col, corr, chain temps) + small mu bits.
    per_row = FF * (4 * sig_isz + 8 * 4) + F * (2 * mu_isz + 2 * 4 + 8)
    avail = max(per_row, ws_budget - const_bytes)
    tb = max(1, avail // per_row)
    # Bound unrolled vector code: keep full-tile temporaries <= ~1M elements.
    tb = min(tb, max(1, (1 << 20) // FF))
    if B > 1:  # >= 2 grid steps so v7x's two TensorCores both get work
        tb = min(tb, pl.cdiv(B, 2))
    tb = min(tb, B)
    # (TB, FF) block: second-minor dim must be a multiple of 8 or the full dim.
    if tb < B:
        tb = max(8, (tb // 8) * 8)
        if tb >= B:
            tb = B
    return int(tb)


def _pick_tb_padded(B, F, sig_isz, mu_isz, ws_budget):
    f_lane = _round_up(F, 128)   # lane padding of the trailing dim in VMEM
    f_sub = _round_up(F, 8)
    tile_elems = f_sub * f_lane
    # sigma in + out (double-buffered, padded layout) + ~6 f32 temporaries.
    per_row = tile_elems * (4 * sig_isz + 6 * 4) + F * (2 * mu_isz + 2 * 4 + 8)
    tb = max(1, ws_budget // per_row)
    tb = min(tb, max(1, (1 << 20) // tile_elems))
    if B > 1:
        tb = min(tb, pl.cdiv(B, 2))
    return int(min(tb, B))


# ----------------------------------------------------------------------------
# Public wrapper.
# ----------------------------------------------------------------------------
@functools.partial(jax.jit, static_argnames=("assume_symmetric",))
def vdp_softmax(mu, sigma, assume_symmetric=False):
    """Pallas equivalent of VDP_Softmax.forward(mu, sigma) with dim=1.

    mu: (B, F), sigma: (B, F, F)  ->  (mu_y (B, F), sigma_y (B, F, F))
    Set assume_symmetric=True only if sigma is guaranteed symmetric.
    """
    B, F = mu.shape
    assert sigma.shape == (B, F, F), (mu.shape, sigma.shape)
    FF = F * F
    sig_isz = jnp.dtype(sigma.dtype).itemsize
    mu_isz = jnp.dtype(mu.dtype).itemsize
    ws_budget, vmem_limit = _vmem_budgets()

    use_flat = (F < 128) and (FF % 128 == 0)

    if use_flat:
        tb = _pick_tb_flat(B, F, sig_isz, mu_isz, ws_budget)
        grid = (pl.cdiv(B, tb),)

        # 0/1 selector matrices over the flattened lane axis l = i*F + j:
        #   e_row[i, l] = [l // F == i]   e_col[j, l] = [l % F == j]
        lane = jnp.arange(FF, dtype=jnp.int32)
        fid = jnp.arange(F, dtype=jnp.int32)
        e_row = ((lane // F)[None, :] == fid[:, None]).astype(jnp.float32)
        e_col = ((lane % F)[None, :] == fid[:, None]).astype(jnp.float32)
        r_row = e_row.T      # (FF, F), for the v reduction
        r_col = e_col.T      # (FF, F), for the w reduction

        kern = functools.partial(_vdp_softmax_kernel_flat,
                                 assume_symmetric=assume_symmetric)
        mu_y, sig_y_flat = pl.pallas_call(
            kern,
            out_shape=(
                jax.ShapeDtypeStruct((B, F), mu.dtype),
                jax.ShapeDtypeStruct((B, FF), sigma.dtype),
            ),
            grid=grid,
            in_specs=[
                pl.BlockSpec((tb, F), lambda b: (b, 0)),
                pl.BlockSpec((tb, FF), lambda b: (b, 0)),
                pl.BlockSpec((F, FF), lambda b: (0, 0)),   # constants: same block
                pl.BlockSpec((F, FF), lambda b: (0, 0)),   # every step -> no re-DMA
                pl.BlockSpec((FF, F), lambda b: (0, 0)),
                pl.BlockSpec((FF, F), lambda b: (0, 0)),
            ],
            out_specs=(
                pl.BlockSpec((tb, F), lambda b: (b, 0)),
                pl.BlockSpec((tb, FF), lambda b: (b, 0)),
            ),
            compiler_params=pltpu.CompilerParams(
                dimension_semantics=("parallel",),
                vmem_limit_bytes=int(vmem_limit),
            ),
        )(mu, sigma.reshape(B, FF), e_row, e_col, r_row, r_col)
        return mu_y, sig_y_flat.reshape(B, F, F)

    # General path (F >= 128 or F*F not a multiple of 128): 3-D blocks whose
    # trailing dims equal the full (F, F), with lane padding charged to VMEM.
    tb = _pick_tb_padded(B, F, sig_isz, mu_isz, ws_budget)
    grid = (pl.cdiv(B, tb),)
    mu3 = mu.reshape(B, 1, F)

    kern = functools.partial(_vdp_softmax_kernel_padded,
                             assume_symmetric=assume_symmetric)
    mu3_y, sigma_y = pl.pallas_call(
        kern,
        out_shape=(
            jax.ShapeDtypeStruct((B, 1, F), mu.dtype),
            jax.ShapeDtypeStruct((B, F, F), sigma.dtype),
        ),
        grid=grid,
        in_specs=[
            pl.BlockSpec((tb, 1, F), lambda b: (b, 0, 0)),
            pl.BlockSpec((tb, F, F), lambda b: (b, 0, 0)),
        ],
        out_specs=(
            pl.BlockSpec((tb, 1, F), lambda b: (b, 0, 0)),
            pl.BlockSpec((tb, F, F), lambda b: (b, 0, 0)),
        ),
        compiler_params=pltpu.CompilerParams(
            dimension_semantics=("parallel",),
            vmem_limit_bytes=int(vmem_limit),
        ),
    )(mu3, sigma)
    return mu3_y.reshape(B, F), sigma_y


def vdp_softmax_ref(mu, sigma):
    """Pure-JAX reference mirroring the PyTorch forward exactly."""
    p = jax.nn.softmax(mu, axis=1)                                   # (B, F)
    grad_f1 = jnp.einsum("bi,bj->bij", p, p)                         # p p^T
    diag_f = p[:, :, None] * jnp.eye(p.shape[1], dtype=p.dtype)[None]
    grad_soft = diag_f - grad_f1                                     # (B, F, F)
    sigma_y = jnp.matmul(grad_soft,
                         jnp.matmul(sigma, jnp.swapaxes(grad_soft, 1, 2)))
    return p, sigma_y


if __name__ == "__main__":
    key = jax.random.PRNGKey(0)
    k1, k2, k3, k4 = jax.random.split(key, 4)

    # Case 1: lane-dense flat path (F*F % 128 == 0): B=16, F=32, symmetric sigma.
    B, F = 16, 32
    mu = jax.random.normal(k1, (B, F), dtype=jnp.float32)
    a = jax.random.normal(k2, (B, F, F), dtype=jnp.float32)
    sigma = 0.5 * (a + jnp.swapaxes(a, 1, 2))      # covariance-like (symmetric)

    mu_y, sigma_y = vdp_softmax(mu, sigma)
    jax.block_until_ready((mu_y, sigma_y))
    mu_y_ref, sigma_y_ref = vdp_softmax_ref(mu, sigma)
    assert mu_y.shape == (B, F) and sigma_y.shape == (B, F, F)
    assert jnp.allclose(mu_y, mu_y_ref, atol=1e-6), "mu_y mismatch (flat path)"
    assert jnp.allclose(sigma_y, sigma_y_ref, atol=1e-5, rtol=1e-5), \
        "sigma_y mismatch (flat path)"

    # Symmetric fast path (valid here: sigma is symmetric).
    mu_y_s, sigma_y_s = vdp_softmax(mu, sigma, assume_symmetric=True)
    jax.block_until_ready((mu_y_s, sigma_y_s))
    assert jnp.allclose(sigma_y_s, sigma_y_ref, atol=1e-5, rtol=1e-5), \
        "sigma_y mismatch (symmetric fast path)"

    # Case 2: general padded path (F*F not a multiple of 128), non-symmetric sigma.
    B2, F2 = 6, 24
    mu2 = jax.random.normal(k3, (B2, F2), dtype=jnp.float32)
    sigma2 = jax.random.normal(k4, (B2, F2, F2), dtype=jnp.float32)
    mu2_y, sigma2_y = vdp_softmax(mu2, sigma2)
    jax.block_until_ready((mu2_y, sigma2_y))
    mu2_y_ref, sigma2_y_ref = vdp_softmax_ref(mu2, sigma2)
    assert jnp.allclose(mu2_y, mu2_y_ref, atol=1e-6), "mu_y mismatch (padded path)"
    assert jnp.allclose(sigma2_y, sigma2_y_ref, atol=1e-5, rtol=1e-5), \
        "sigma_y mismatch (padded path)"

    print("KERNEL_OK")
</pallas_src>

<mosaic_0001>
module attributes {stable_mosaic.version = 11 : i64} {
  func.func @_vdp_softmax_kernel_flat(%arg0: i32, %arg1: memref<8x32xf32, #tpu.memory_space<vmem>>, %arg2: memref<8x1024xf32, #tpu.memory_space<vmem>>, %arg3: memref<32x1024xf32, #tpu.memory_space<vmem>>, %arg4: memref<32x1024xf32, #tpu.memory_space<vmem>>, %arg5: memref<1024x32xf32, #tpu.memory_space<vmem>>, %arg6: memref<1024x32xf32, #tpu.memory_space<vmem>>, %arg7: memref<8x32xf32, #tpu.memory_space<vmem>>, %arg8: memref<8x1024xf32, #tpu.memory_space<vmem>>) attributes {dimension_semantics = [#tpu.dimension_semantics<parallel>], iteration_bounds = array<i64: 2>, scalar_prefetch = 0 : i64, scratch_operands = 0 : i64, tpu.core_type = #tpu.core_type<tc>, window_params = [{transform_indices = @transform_0, window_bounds = array<i64: 8, 32>}, {transform_indices = @transform_1, window_bounds = array<i64: 8, 1024>}, {pipeline_mode = #tpu.pipeline_mode<synchronous>, transform_indices = @transform_2, window_bounds = array<i64: 32, 1024>}, {pipeline_mode = #tpu.pipeline_mode<synchronous>, transform_indices = @transform_3, window_bounds = array<i64: 32, 1024>}, {pipeline_mode = #tpu.pipeline_mode<synchronous>, transform_indices = @transform_4, window_bounds = array<i64: 1024, 32>}, {pipeline_mode = #tpu.pipeline_mode<synchronous>, transform_indices = @transform_5, window_bounds = array<i64: 1024, 32>}, {transform_indices = @transform_6, window_bounds = array<i64: 8, 32>}, {transform_indices = @transform_7, window_bounds = array<i64: 8, 1024>}]} {
    %c0 = arith.constant 0 : index
    %c0_0 = arith.constant 0 : index
    %0 = vector.load %arg1[%c0, %c0_0] : memref<8x32xf32, #tpu.memory_space<vmem>>, vector<8x32xf32>
    %cst = arith.constant dense<0xFF800000> : vector<8xf32>
    %1 = vector.multi_reduction <maximumf>, %0, %cst [1] : vector<8x32xf32> to vector<8xf32>
    %2 = vector.shape_cast %1 : vector<8xf32> to vector<8x1xf32>
    %3 = vector.broadcast %2 : vector<8x1xf32> to vector<8x32xf32>
    %4 = arith.subf %0, %3 : vector<8x32xf32>
    %5 = math.exp %4 : vector<8x32xf32>
    %cst_1 = arith.constant dense<0.000000e+00> : vector<8xf32>
    %6 = vector.multi_reduction <add>, %5, %cst_1 [1] : vector<8x32xf32> to vector<8xf32>
    %7 = vector.shape_cast %6 : vector<8xf32> to vector<8x1xf32>
    %8 = vector.broadcast %7 : vector<8x1xf32> to vector<8x32xf32>
    %9 = arith.divf %5, %8 : vector<8x32xf32>
    %c0_2 = arith.constant 0 : index
    %c0_3 = arith.constant 0 : index
    %10 = vector.load %arg7[%c0_2, %c0_3] : memref<8x32xf32, #tpu.memory_space<vmem>>, vector<8x32xf32>
    tpu.vector_store %arg7[%c0_2, %c0_3], %9 {strides = array<i32>} : memref<8x32xf32, #tpu.memory_space<vmem>>, vector<8x32xf32>,
    %c0_4 = arith.constant 0 : index
    %c0_5 = arith.constant 0 : index
    %11 = vector.load %arg2[%c0_4, %c0_5] : memref<8x1024xf32, #tpu.memory_space<vmem>>, vector<8x1024xf32>
    %c0_6 = arith.constant 0 : index
    %c0_7 = arith.constant 0 : index
    %12 = vector.load %arg3[%c0_6, %c0_7] : memref<32x1024xf32, #tpu.memory_space<vmem>>, vector<32x1024xf32>
    %c0_8 = arith.constant 0 : index
    %c0_9 = arith.constant 0 : index
    %13 = vector.load %arg4[%c0_8, %c0_9] : memref<32x1024xf32, #tpu.memory_space<vmem>>, vector<32x1024xf32>
    %cst_10 = arith.constant dense<0.000000e+00> : vector<8x1024xf32>
    %14 = tpu.matmul %9, %12, %cst_10 {dimension_numbers = #tpu.dot_dimension_numbers<[1], [0], [0], [1], [0, 0, 1, 1], [], []>} : vector<8x32xf32>, vector<32x1024xf32>, vector<8x1024xf32> -> vector<8x1024xf32>
    %cst_11 = arith.constant dense<0.000000e+00> : vector<8x1024xf32>
    %15 = tpu.matmul %9, %13, %cst_11 {dimension_numbers = #tpu.dot_dimension_numbers<[1], [0], [0], [1], [0, 0, 1, 1], [], []>} : vector<8x32xf32>, vector<32x1024xf32>, vector<8x1024xf32> -> vector<8x1024xf32>
    %16 = arith.mulf %11, %15 : vector<8x1024xf32>
    %c0_12 = arith.constant 0 : index
    %c0_13 = arith.constant 0 : index
    %17 = vector.load %arg5[%c0_12, %c0_13] : memref<1024x32xf32, #tpu.memory_space<vmem>>, vector<1024x32xf32>
    %cst_14 = arith.constant dense<0.000000e+00> : vector<8x32xf32>
    %18 = tpu.matmul %16, %17, %cst_14 {dimension_numbers = #tpu.dot_dimension_numbers<[1], [0], [0], [1], [0, 0, 1, 1], [], []>} : vector<8x1024xf32>, vector<1024x32xf32>, vector<8x32xf32> -> vector<8x32xf32>
    %19 = arith.mulf %11, %14 : vector<8x1024xf32>
    %c0_15 = arith.constant 0 : index
    %c0_16 = arith.constant 0 : index
    %20 = vector.load %arg6[%c0_15, %c0_16] : memref<1024x32xf32, #tpu.memory_space<vmem>>, vector<1024x32xf32>
    %cst_17 = arith.constant dense<0.000000e+00> : vector<8x32xf32>
    %21 = tpu.matmul %19, %20, %cst_17 {dimension_numbers = #tpu.dot_dimension_numbers<[1], [0], [0], [1], [0, 0, 1, 1], [], []>} : vector<8x1024xf32>, vector<1024x32xf32>, vector<8x32xf32> -> vector<8x32xf32>
    %22 = arith.mulf %18, %9 : vector<8x32xf32>
    %cst_18 = arith.constant dense<0.000000e+00> : vector<8xf32>
    %23 = vector.multi_reduction <add>, %22, %cst_18 [1] : vector<8x32xf32> to vector<8xf32>
    %24 = vector.shape_cast %23 : vector<8xf32> to vector<8x1xf32>
    %25 = vector.broadcast %24 : vector<8x1xf32> to vector<8x32xf32>
    %26 = arith.subf %18, %25 : vector<8x32xf32>
    %cst_19 = arith.constant dense<0.000000e+00> : vector<8x1024xf32>
    %27 = tpu.matmul %26, %12, %cst_19 {dimension_numbers = #tpu.dot_dimension_numbers<[1], [0], [0], [1], [0, 0, 1, 1], [], []>} : vector<8x32xf32>, vector<32x1024xf32>, vector<8x1024xf32> -> vector<8x1024xf32>
    %cst_20 = arith.constant dense<0.000000e+00> : vector<8x1024xf32>
    %28 = tpu.matmul %21, %13, %cst_20 {dimension_numbers = #tpu.dot_dimension_numbers<[1], [0], [0], [1], [0, 0, 1, 1], [], []>} : vector<8x32xf32>, vector<32x1024xf32>, vector<8x1024xf32> -> vector<8x1024xf32>
    %29 = arith.addf %27, %28 : vector<8x1024xf32>
    %30 = arith.subf %11, %29 : vector<8x1024xf32>
    %31 = arith.mulf %14, %15 : vector<8x1024xf32>
    %32 = arith.mulf %30, %31 : vector<8x1024xf32>
    %c0_21 = arith.constant 0 : index
    %c0_22 = arith.constant 0 : index
    %33 = vector.load %arg8[%c0_21, %c0_22] : memref<8x1024xf32, #tpu.memory_space<vmem>>, vector<8x1024xf32>
    tpu.vector_store %arg8[%c0_21, %c0_22], %32 {strides = array<i32>} : memref<8x1024xf32, #tpu.memory_space<vmem>>, vector<8x1024xf32>,
    return
  }
  func.func @transform_0(%arg0: i32) -> (i32, i32) {
    %c0_i32 = arith.constant 0 : i32
    %c0_i32_0 = arith.constant 0 : i32
    return %arg0, %c0_i32 : i32, i32
  }
  func.func @transform_1(%arg0: i32) -> (i32, i32) {
    %c0_i32 = arith.constant 0 : i32
    %c0_i32_0 = arith.constant 0 : i32
    return %arg0, %c0_i32 : i32, i32
  }
  func.func @transform_2(%arg0: i32) -> (i32, i32) {
    %c0_i32 = arith.constant 0 : i32
    %c0_i32_0 = arith.constant 0 : i32
    %c0_i32_1 = arith.constant 0 : i32
    return %c0_i32, %c0_i32_0 : i32, i32
  }
  func.func @transform_3(%arg0: i32) -> (i32, i32) {
    %c0_i32 = arith.constant 0 : i32
    %c0_i32_0 = arith.constant 0 : i32
    %c0_i32_1 = arith.constant 0 : i32
    return %c0_i32, %c0_i32_0 : i32, i32
  }
  func.func @transform_4(%arg0: i32) -> (i32, i32) {
    %c0_i32 = arith.constant 0 : i32
    %c0_i32_0 = arith.constant 0 : i32
    %c0_i32_1 = arith.constant 0 : i32
    return %c0_i32, %c0_i32_0 : i32, i32
  }
  func.func @transform_5(%arg0: i32) -> (i32, i32) {
    %c0_i32 = arith.constant 0 : i32
    %c0_i32_0 = arith.constant 0 : i32
    %c0_i32_1 = arith.constant 0 : i32
    return %c0_i32, %c0_i32_0 : i32, i32
  }
  func.func @transform_6(%arg0: i32) -> (i32, i32) {
    %c0_i32 = arith.constant 0 : i32
    %c0_i32_0 = arith.constant 0 : i32
    return %arg0, %c0_i32 : i32, i32
  }
  func.func @transform_7(%arg0: i32) -> (i32, i32) {
    %c0_i32 = arith.constant 0 : i32
    %c0_i32_0 = arith.constant 0 : i32
    return %arg0, %c0_i32 : i32, i32
  }
}

</mosaic_0001>

<llo_original>
// kernel: vdp_softmax.1
$region0: #{vdp_softmax.1}
  #allocation0 [shape = 'u32[]', space=smem, size = 0x4, offset = 0x4, fixed_abs, tag = 'smem constant byte address 0x4 - core index']
  #allocation1 [shape = 'u32[144,128]{1,0:T(1,128)}', space=vmem, size = 0x12000, scoped, tag = 'internal scratch']
  %s0 = inlined_call_operand.vmem [shape: f32[16,32], index: 0, kind: input, shape index: {}]
  %s1 = inlined_call_operand.vmem [shape: f32[16,1024], index: 1, kind: input, shape index: {}]
  %s2 = inlined_call_operand.vmem [shape: f32[32,1024], index: 2, kind: input, shape index: {}]
  %s3 = inlined_call_operand.vmem [shape: f32[32,1024], index: 3, kind: input, shape index: {}]
  %s4 = inlined_call_operand.vmem [shape: f32[1024,32], index: 4, kind: input, shape index: {}]
  %s5 = inlined_call_operand.vmem [shape: f32[1024,32], index: 5, kind: input, shape index: {}]
  %s6 = inlined_call_operand.hbm [shape: f32[16,32], index: 6, kind: output, shape index: {0}]
  %s7 = inlined_call_operand.vmem [shape: f32[16,1024], index: 7, kind: output, shape index: {1}]
  %8 = xla_tuple %s6, %s7
  %s9 = sld [smem:[#allocation0]]
  $region65: #{vdp_softmax.1} parent=0
    _
  %s11 = ssub.s32 1, %s9
  %s12 = scalar_select 0, %s11, %s9
  $region1: #{vdp_softmax.1} parent=0
    #allocation2 [shape = 'u8[8192]{0}', space=vmem, size = 0x2000, scoped, tag = 'output window, operand 0']
    #allocation3 [shape = 's32[2]{0}', space=sflag, size = 0x8, scoped, tag = 'scoped memory for vdp_softmax.1']
    %13 = vsyncpa [#allocation3], 0
    %s14 = scalar_lea.sflag [#allocation3], 1
    %15 = vsyncpa %s14, 0
    loop: start=0, step=1, limit=4
    $region2: #{vdp_softmax.1} parent=1 // loop_pre_header
      _
    $region3: #{vdp_softmax.1} parent=1 // loop_header
      %s17 = sphi 0, %s21
      %p18 = scmp.ge.s32.totalorder %s17, 4
      %s27 = sphi 0, %s29
      %s30 = sphi 0, %s27
      %s31 = sphi 0, %s30
      %s47 = sphi 0, %s31
      %s53 = sphi 0, %s55
      %s56 = sphi 0, %s53
      %s57 = sphi 0, %s56
      %s73 = sphi 0, %s57
      %s77 = sphi 0, %s77
      %s79 = sphi 0, %s77
      %s80 = sphi 0, %s79
      %s94 = sphi 0, %s80
      %s98 = sphi 0, %s98
      %s100 = sphi 0, %s98
      %s101 = sphi 0, %s100
      %s115 = sphi 0, %s101
      %s119 = sphi 0, %s119
      %s121 = sphi 0, %s119
      %s122 = sphi 0, %s121
      %s136 = sphi 0, %s122
      %s140 = sphi 0, %s140
      %s142 = sphi 0, %s140
      %s143 = sphi 0, %s142
      %s157 = sphi 0, %s143
      %s163 = sphi 0, %s165
      %s166 = sphi 0, %s163
      %s167 = sphi 0, %s166
      %s183 = sphi 0, %s167
      %s189 = sphi 0, %s191
      %s192 = sphi 0, %s189
      %s193 = sphi 0, %s192
      %s209 = sphi 0, %s193
    $region4: #{vdp_softmax.1} parent=1 // loop_header_branch
      %20 = sbr.rel (%p18) target = $region8
    $region5: #{vdp_softmax.1} parent=1 // loop_body
      %s22 = ssub.s32 %s17, 1
      %s23 = ssub.s32 %s17, 2
      %s24 = sadd.s32 %s17, 1
      %s25 = ssub.s32 %s17, %s24
      %p26 = scmp.eq.s32.totalorder %s25, 0
      %s28 = sadd.s32 %s27, 1
      %s29 = scalar_select %p26, %s27, %s28
      %p32 = pneg %p26
      %p33 = scmp.eq.s32.totalorder %s17, 1
      %p34 = por %p32, %p33
      %p35 = scmp.ne.s32.totalorder %s27, %s30
      %p36 = scmp.eq.s32.totalorder %s17, 0
      %p37 = por %p35, %p36
      %p38 = scmp.ne.s32.totalorder %s27, %s30
      %p39 = scmp.eq.s32.totalorder %s22, 1
      %p40 = por %p38, %p39
      %p41 = scmp.ne.s32.totalorder %s30, %s31
      %p42 = scmp.eq.s32.totalorder %s22, 0
      %p43 = por %p41, %p42
      %p44 = scmp.ne.s32.totalorder %s30, %s31
      %p45 = scmp.eq.s32.totalorder %s23, 1
      %p46 = por %p44, %p45
      %p48 = scmp.ne.s32.totalorder %s31, %s47
      %p49 = scmp.eq.s32.totalorder %s23, 0
      %p50 = por %p48, %p49
      %s51 = ssub.s32 %s17, %s24
      %p52 = scmp.eq.s32.totalorder %s51, 0
      %s54 = sadd.s32 %s53, 1
      %s55 = scalar_select %p52, %s53, %s54
      %p58 = pneg %p52
      %p59 = scmp.eq.s32.totalorder %s17, 1
      %p60 = por %p58, %p59
      %p61 = scmp.ne.s32.totalorder %s53, %s56
      %p62 = scmp.eq.s32.totalorder %s17, 0
      %p63 = por %p61, %p62
      %p64 = scmp.ne.s32.totalorder %s53, %s56
      %p65 = scmp.eq.s32.totalorder %s22, 1
      %p66 = por %p64, %p65
      %p67 = scmp.ne.s32.totalorder %s56, %s57
      %p68 = scmp.eq.s32.totalorder %s22, 0
      %p69 = por %p67, %p68
      %p70 = scmp.ne.s32.totalorder %s56, %s57
      %p71 = scmp.eq.s32.totalorder %s23, 1
      %p72 = por %p70, %p71
      %p74 = scmp.ne.s32.totalorder %s57, %s73
      %p75 = scmp.eq.s32.totalorder %s23, 0
      %p76 = por %p74, %p75
      %s78 = sadd.s32 %s77, 1
      %p81 = scmp.eq.s32.totalorder %s17, 1
      %p82 = scmp.ne.s32.totalorder %s77, %s79
      %p83 = scmp.eq.s32.totalorder %s17, 0
      %p84 = por %p82, %p83
      %p85 = scmp.ne.s32.totalorder %s77, %s79
      %p86 = scmp.eq.s32.totalorder %s22, 1
      %p87 = por %p85, %p86
      %p88 = scmp.ne.s32.totalorder %s79, %s80
      %p89 = scmp.eq.s32.totalorder %s22, 0
      %p90 = por %p88, %p89
      %p91 = scmp.ne.s32.totalorder %s79, %s80
      %p92 = scmp.eq.s32.totalorder %s23, 1
      %p93 = por %p91, %p92
      %p95 = scmp.ne.s32.totalorder %s80, %s94
      %p96 = scmp.eq.s32.totalorder %s23, 0
      %p97 = por %p95, %p96
      %s99 = sadd.s32 %s98, 1
      %p102 = scmp.eq.s32.totalorder %s17, 1
      %p103 = scmp.ne.s32.totalorder %s98, %s100
      %p104 = scmp.eq.s32.totalorder %s17, 0
      %p105 = por %p103, %p104
      %p106 = scmp.ne.s32.totalorder %s98, %s100
      %p107 = scmp.eq.s32.totalorder %s22, 1
      %p108 = por %p106, %p107
      %p109 = scmp.ne.s32.totalorder %s100, %s101
      %p110 = scmp.eq.s32.totalorder %s22, 0
      %p111 = por %p109, %p110
      %p112 = scmp.ne.s32.totalorder %s100, %s101
      %p113 = scmp.eq.s32.totalorder %s23, 1
      %p114 = por %p112, %p113
      %p116 = scmp.ne.s32.totalorder %s101, %s115
      %p117 = scmp.eq.s32.totalorder %s23, 0
      %p118 = por %p116, %p117
      %s120 = sadd.s32 %s119, 1
      %p123 = scmp.eq.s32.totalorder %s17, 1
      %p124 = scmp.ne.s32.totalorder %s119, %s121
      %p125 = scmp.eq.s32.totalorder %s17, 0
      %p126 = por %p124, %p125
      %p127 = scmp.ne.s32.totalorder %s119, %s121
      %p128 = scmp.eq.s32.totalorder %s22, 1
      %p129 = por %p127, %p128
      %p130 = scmp.ne.s32.totalorder %s121, %s122
      %p131 = scmp.eq.s32.totalorder %s22, 0
      %p132 = por %p130, %p131
      %p133 = scmp.ne.s32.totalorder %s121, %s122
      %p134 = scmp.eq.s32.totalorder %s23, 1
      %p135 = por %p133, %p134
      %p137 = scmp.ne.s32.totalorder %s122, %s136
      %p138 = scmp.eq.s32.totalorder %s23, 0
      %p139 = por %p137, %p138
      %s141 = sadd.s32 %s140, 1
      %p144 = scmp.eq.s32.totalorder %s17, 1
      %p145 = scmp.ne.s32.totalorder %s140, %s142
      %p146 = scmp.eq.s32.totalorder %s17, 0
      %p147 = por %p145, %p146
      %p148 = scmp.ne.s32.totalorder %s140, %s142
      %p149 = scmp.eq.s32.totalorder %s22, 1
      %p150 = por %p148, %p149
      %p151 = scmp.ne.s32.totalorder %s142, %s143
      %p152 = scmp.eq.s32.totalorder %s22, 0
      %p153 = por %p151, %p152
      %p154 = scmp.ne.s32.totalorder %s142, %s143
      %p155 = scmp.eq.s32.totalorder %s23, 1
      %p156 = por %p154, %p155
      %p158 = scmp.ne.s32.totalorder %s143, %s157
      %p159 = scmp.eq.s32.totalorder %s23, 0
      %p160 = por %p158, %p159
      %s161 = ssub.s32 %s17, %s24
      %p162 = scmp.eq.s32.totalorder %s161, 0
      %s164 = sadd.s32 %s163, 1
      %s165 = scalar_select %p162, %s163, %s164
      %p168 = pneg %p162
      %p169 = scmp.eq.s32.totalorder %s17, 1
      %p170 = por %p168, %p169
      %p171 = scmp.ne.s32.totalorder %s163, %s166
      %p172 = scmp.eq.s32.totalorder %s17, 0
      %p173 = por %p171, %p172
      %p174 = scmp.ne.s32.totalorder %s163, %s166
      %p175 = scmp.eq.s32.totalorder %s22, 1
      %p176 = por %p174, %p175
      %p177 = scmp.ne.s32.totalorder %s166, %s167
      %p178 = scmp.eq.s32.totalorder %s22, 0
      %p179 = por %p177, %p178
      %p180 = scmp.ne.s32.totalorder %s166, %s167
      %p181 = scmp.eq.s32.totalorder %s23, 1
      %p182 = por %p180, %p181
      %p184 = scmp.ne.s32.totalorder %s167, %s183
      %p185 = scmp.eq.s32.totalorder %s23, 0
      %p186 = por %p184, %p185
      %s187 = ssub.s32 %s17, %s24
      %p188 = scmp.eq.s32.totalorder %s187, 0
      %s190 = sadd.s32 %s189, 1
      %s191 = scalar_select %p188, %s189, %s190
      %p194 = pneg %p188
      %p195 = scmp.eq.s32.totalorder %s17, 1
      %p196 = por %p194, %p195
      %p197 = scmp.ne.s32.totalorder %s189, %s192
      %p198 = scmp.eq.s32.totalorder %s17, 0
      %p199 = por %p197, %p198
      %p200 = scmp.ne.s32.totalorder %s189, %s192
      %p201 = scmp.eq.s32.totalorder %s22, 1
      %p202 = por %p200, %p201
      %p203 = scmp.ne.s32.totalorder %s192, %s193
      %p204 = scmp.eq.s32.totalorder %s22, 0
      %p205 = por %p203, %p204
      %p206 = scmp.ne.s32.totalorder %s192, %s193
      %p207 = scmp.eq.s32.totalorder %s23, 1
      %p208 = por %p206, %p207
      %p210 = scmp.ne.s32.totalorder %s193, %s209
      %p211 = scmp.eq.s32.totalorder %s23, 0
      %p212 = por %p210, %p211
      %p213 = scmp.le.s32.totalorder 1, %s17
      %p214 = scmp.lt.s32.totalorder %s17, 3
      %p215 = pnand %p213, %p214
      %p216 = pneg %p215
      // Predicated region
      $region9: #{vdp_softmax.1} parent=5 // pred_check
        _
      $region10: #{vdp_softmax.1} parent=5 // pred_check_branch
        %218 = sbr.rel (%p215) target = $region12
      $region11: #{vdp_softmax.1} parent=5 // pred_region
        %s219 = ssub.s32 %s17, 1
        // Predicated region
        $region13: #{vdp_softmax.1} parent=11 // pred_check
          %p220 = pneg %p90
        $region14: #{vdp_softmax.1} parent=11 // pred_check_branch
          %222 = sbr.rel (%p220) target = $region16
        $region15: #{vdp_softmax.1} parent=11 // pred_region
          _
        $region16: #{vdp_softmax.1} parent=11 // pred_fallthru
          _
        // Predicated region
        $region17: #{vdp_softmax.1} parent=11 // pred_check
          %p223 = pneg %p111
        $region18: #{vdp_softmax.1} parent=11 // pred_check_branch
          %225 = sbr.rel (%p223) target = $region20
        $region19: #{vdp_softmax.1} parent=11 // pred_region
          _
        $region20: #{vdp_softmax.1} parent=11 // pred_fallthru
          _
        // Predicated region
        $region21: #{vdp_softmax.1} parent=11 // pred_check
          %p226 = pneg %p132
        $region22: #{vdp_softmax.1} parent=11 // pred_check_branch
          %228 = sbr.rel (%p226) target = $region24
        $region23: #{vdp_softmax.1} parent=11 // pred_region
          _
        $region24: #{vdp_softmax.1} parent=11 // pred_fallthru
          _
        // Predicated region
        $region25: #{vdp_softmax.1} parent=11 // pred_check
          %p229 = pneg %p153
        $region26: #{vdp_softmax.1} parent=11 // pred_check_branch
          %231 = sbr.rel (%p229) target = $region28
        $region27: #{vdp_softmax.1} parent=11 // pred_region
          _
        $region28: #{vdp_softmax.1} parent=11 // pred_fallthru
          _
      $region12: #{vdp_softmax.1} parent=5 // pred_fallthru
        _
      %p232 = scmp.lt.s32.totalorder %s17, 2
      // Predicated region
      $region29: #{vdp_softmax.1} parent=5 // pred_check
        %p233 = pneg %p232
      $region30: #{vdp_softmax.1} parent=5 // pred_check_branch
        %235 = sbr.rel (%p233) target = $region32
      $region31: #{vdp_softmax.1} parent=5 // pred_region
        // Predicated region
        $region33: #{vdp_softmax.1} parent=31 // pred_check
          %p236 = pneg %p37
        $region34: #{vdp_softmax.1} parent=31 // pred_check_branch
          %238 = sbr.rel (%p236) target = $region36
        $region35: #{vdp_softmax.1} parent=31 // pred_region
          %p239 = scmp.lt.s32.totalorder %s17, 1
          %s240 = scalar_select %p239, %s17, 1
          %s241 = smul.addr %s240, 8
          %s242 = scalar_lea.vmem %s0, %s241
        $region36: #{vdp_softmax.1} parent=31 // pred_fallthru
          _
        // Predicated region
        $region37: #{vdp_softmax.1} parent=31 // pred_check
          %p243 = pneg %p63
        $region38: #{vdp_softmax.1} parent=31 // pred_check_branch
          %245 = sbr.rel (%p243) target = $region40
        $region39: #{vdp_softmax.1} parent=31 // pred_region
          %p246 = scmp.lt.s32.totalorder %s17, 1
          %s247 = scalar_select %p246, %s17, 1
          %s248 = smul.addr %s247, 8
          %s249 = smul.addr %s248, 8
          %s250 = scalar_lea.vmem %s1, %s249
        $region40: #{vdp_softmax.1} parent=31 // pred_fallthru
          _
      $region32: #{vdp_softmax.1} parent=5 // pred_fallthru
        _
      %p251 = scmp.le.s32.totalorder 1, %s17
      %p252 = scmp.lt.s32.totalorder %s17, 3
      %p253 = pnand %p251, %p252
      %p254 = pneg %p253
      // Predicated region
      $region41: #{vdp_softmax.1} parent=5 // pred_check
        _
      $region42: #{vdp_softmax.1} parent=5 // pred_check_branch
        %256 = sbr.rel (%p253) target = $region44
      $region43: #{vdp_softmax.1} parent=5 // pred_region
        %s257 = ssub.s32 %s17, 1
        %p258 = scmp.lt.s32.totalorder %s22, 1
        %s259 = scalar_select %p258, %s22, 1
        %s260 = smul.addr %s259, 8
        %s261 = scalar_lea.vmem %s0, %s260
        %p262 = pneg %p43
        %p263 = pneg %p40
        %p264 = scmp.lt.s32.totalorder %s22, 1
        %s265 = scalar_select %p264, %s22, 1
        %s266 = smul.addr %s265, 8
        %s267 = smul.addr %s266, 8
        %s268 = scalar_lea.vmem %s1, %s267
        %p269 = pneg %p69
        %p270 = pneg %p66
        %p271 = pneg %p90
        %p272 = pneg %p87
        %p273 = pneg %p111
        %p274 = pneg %p108
        %p275 = pneg %p132
        %p276 = pneg %p129
        %p277 = pneg %p153
        %p278 = pneg %p150
        %p279 = pneg %p179
        %p280 = pneg %p176
        %s281 = sand.u32 %s166, 1
        %s282 = scalar_lea.sflag [#allocation3], %s281
        %s283 = sand.u32 %s166, 1
        %s284 = smul.addr %s283, 8
        %s285 = scalar_lea.vmem [#allocation2], %s284
        %p286 = pneg %p205
        %p287 = pneg %p202
        %p288 = scmp.lt.s32.totalorder %s22, 1
        %s289 = scalar_select %p288, %s22, 1
        %s290 = smul.addr %s289, 8
        %s291 = smul.addr %s290, 8
        %s292 = scalar_lea.vmem %s7, %s291
        %p293 = scmp.lt.s32.totalorder %s22, 1
        %s294 = scalar_select %p293, %s22, 1
        %s295 = smul.addr %s294, 8
        %s296 = scalar_lea.vmem %s0, %s295
        %p297 = scmp.lt.s32.totalorder %s22, 1
        %s298 = scalar_select %p297, %s22, 1
        %s299 = smul.addr %s298, 8
        %s300 = smul.addr %s299, 8
        %s301 = scalar_lea.vmem %s1, %s300
        %p302 = scmp.lt.s32.totalorder %s22, 1
        %s303 = scalar_select %p302, %s22, 1
        %s304 = smul.addr %s303, 8
        %s305 = smul.addr %s304, 8
        %s306 = scalar_lea.vmem %s7, %s305
        %v307 = vld [vmem:[%s296] sm:$0xff]
        %vm308 = vcmask 261120
        %v309 = vsel %vm308, %v307, -inf
        %310 = vmax.xlane.f32.xlu0 %v309
        %v311 = vpop.xlane.xlu0 %310
        %v312 = vsub.f32 %v307, %v311
        %v313 = vmul.f32 %v312, 1.442695
        %v314 = vpow.pop %v313
        %v315 = vsel %vm308, %v314, 0.0
        %316 = vadd.xlane.f32.xlu0 %v315
        %v317 = vpop.xlane.xlu0 %316
        %v318 = vrcp.pop %v317
        %v319 = vmul.f32 %v314, %v318
        %320 = vst.msk [vmem:[%s285] sm:$0xff] %vm308, %v319
        %v321 = vld [vmem:[%s301] sm:$0xff]
        %v322 = vld [vmem:[%s301 + $0x8] sm:$0xff]
        %v323 = vld [vmem:[%s301 + $0x10] sm:$0xff]
        %v324 = vld [vmem:[%s301 + $0x18] sm:$0xff]
        %v325 = vld [vmem:[%s301 + $0x20] sm:$0xff]
        %v326 = vld [vmem:[%s301 + $0x28] sm:$0xff]
        %v327 = vld [vmem:[%s301 + $0x30] sm:$0xff]
        %v328 = vld [vmem:[%s301 + $0x38] sm:$0xff]
        %v329 = vld [vmem:[%s2] sm:$0xff]
        %v330 = vld [vmem:[%s2 + $0x8] sm:$0xff]
        %v331 = vld [vmem:[%s2 + $0x10] sm:$0xff]
        %v332 = vld [vmem:[%s2 + $0x18] sm:$0xff]
        %v333 = vld [vmem:[%s2 + $0x20] sm:$0xff]
        %v334 = vld [vmem:[%s2 + $0x28] sm:$0xff]
        %v335 = vld [vmem:[%s2 + $0x30] sm:$0xff]
        %v336 = vld [vmem:[%s2 + $0x38] sm:$0xff]
        %v337 = vld [vmem:[%s2 + $0x40] sm:$0xff]
        %v338 = vld [vmem:[%s2 + $0x48] sm:$0xff]
        %v339 = vld [vmem:[%s2 + $0x50] sm:$0xff]
        %v340 = vld [vmem:[%s2 + $0x58] sm:$0xff]
        %v341 = vld [vmem:[%s2 + $0x60] sm:$0xff]
        %v342 = vld [vmem:[%s2 + $0x68] sm:$0xff]
        %v343 = vld [vmem:[%s2 + $0x70] sm:$0xff]
        %v344 = vld [vmem:[%s2 + $0x78] sm:$0xff]
        %v345 = vld [vmem:[%s2 + $0x80] sm:$0xff]
        %v346 = vld [vmem:[%s2 + $0x88] sm:$0xff]
        %v347 = vld [vmem:[%s2 + $0x90] sm:$0xff]
        %v348 = vld [vmem:[%s2 + $0x98] sm:$0xff]
        %v349 = vld [vmem:[%s2 + $0xa0] sm:$0xff]
        %v350 = vld [vmem:[%s2 + $0xa8] sm:$0xff]
        %v351 = vld [vmem:[%s2 + $0xb0] sm:$0xff]
        %v352 = vld [vmem:[%s2 + $0xb8] sm:$0xff]
        %v353 = vld [vmem:[%s2 + $0xc0] sm:$0xff]
        %v354 = vld [vmem:[%s2 + $0xc8] sm:$0xff]
        %v355 = vld [vmem:[%s2 + $0xd0] sm:$0xff]
        %v356 = vld [vmem:[%s2 + $0xd8] sm:$0xff]
        %v357 = vld [vmem:[%s2 + $0xe0] sm:$0xff]
        %v358 = vld [vmem:[%s2 + $0xe8] sm:$0xff]
        %v359 = vld [vmem:[%s2 + $0xf0] sm:$0xff]
        %v360 = vld [vmem:[%s2 + $0xf8] sm:$0xff]
        %v361 = vld [vmem:[%s3] sm:$0xff]
        %v362 = vld [vmem:[%s3 + $0x8] sm:$0xff]
        %v363 = vld [vmem:[%s3 + $0x10] sm:$0xff]
        %v364 = vld [vmem:[%s3 + $0x18] sm:$0xff]
        %v365 = vld [vmem:[%s3 + $0x20] sm:$0xff]
        %v366 = vld [vmem:[%s3 + $0x28] sm:$0xff]
        %v367 = vld [vmem:[%s3 + $0x30] sm:$0xff]
        %v368 = vld [vmem:[%s3 + $0x38] sm:$0xff]
        %v369 = vld [vmem:[%s3 + $0x40] sm:$0xff]
        %v370 = vld [vmem:[%s3 + $0x48] sm:$0xff]
        %v371 = vld [vmem:[%s3 + $0x50] sm:$0xff]
        %v372 = vld [vmem:[%s3 + $0x58] sm:$0xff]
        %v373 = vld [vmem:[%s3 + $0x60] sm:$0xff]
        %v374 = vld [vmem:[%s3 + $0x68] sm:$0xff]
        %v375 = vld [vmem:[%s3 + $0x70] sm:$0xff]
        %v376 = vld [vmem:[%s3 + $0x78] sm:$0xff]
        %v377 = vld [vmem:[%s3 + $0x80] sm:$0xff]
        %v378 = vld [vmem:[%s3 + $0x88] sm:$0xff]
        %v379 = vld [vmem:[%s3 + $0x90] sm:$0xff]
        %v380 = vld [vmem:[%s3 + $0x98] sm:$0xff]
        %v381 = vld [vmem:[%s3 + $0xa0] sm:$0xff]
        %v382 = vld [vmem:[%s3 + $0xa8] sm:$0xff]
        %v383 = vld [vmem:[%s3 + $0xb0] sm:$0xff]
        %v384 = vld [vmem:[%s3 + $0xb8] sm:$0xff]
        %v385 = vld [vmem:[%s3 + $0xc0] sm:$0xff]
        %v386 = vld [vmem:[%s3 + $0xc8] sm:$0xff]
        %v387 = vld [vmem:[%s3 + $0xd0] sm:$0xff]
        %v388 = vld [vmem:[%s3 + $0xd8] sm:$0xff]
        %v389 = vld [vmem:[%s3 + $0xe0] sm:$0xff]
        %v390 = vld [vmem:[%s3 + $0xe8] sm:$0xff]
        %v391 = vld [vmem:[%s3 + $0xf0] sm:$0xff]
        %v392 = vld [vmem:[%s3 + $0xf8] sm:$0xff]
        %v394 = vsel %vm308, %v319, 0
        %396 = vmatprep.subr.mxu0 %v330
        %397 = vmatpush1.msra.mxu0 %v329
        %398 = vmatprep.subr.mxu0 %v338
        %399 = vmatpush1.msra.mxu0 %v337
        %400 = vmatprep.subr.mxu0 %v346
        %401 = vmatpush1.msra.mxu0 %v345
        %402 = vmatprep.subr.mxu0 %v354
        %403 = vmatpush1.msra.mxu0 %v353
        %404 = vmatprep.subr.mxu0 0.0
        %405 = vmatpush1.msra.mxu0 0.0
        %406 = vmatprep.subr.mxu0 0.0
        %407 = vmatpush1.msra.mxu0 0.0
        %408 = vmatprep.subr.mxu0 0.0
        %409 = vmatpush1.msra.mxu0 0.0
        %410 = vmatprep.subr.mxu0 0.0
        %411 = vmatpush1.msra.mxu0 0.0
        %412 = vmatprep.subr.mxu0 0.0
        %413 = vmatpush1.msra.mxu0 0.0
        %414 = vmatprep.subr.mxu0 0.0
        %415 = vmatpush1.msra.mxu0 0.0
        %416 = vmatprep.subr.mxu0 0.0
        %417 = vmatpush1.msra.mxu0 0.0
        %418 = vmatprep.subr.mxu0 0.0
        %419 = vmatpush1.msra.mxu0 0.0
        %420 = vmatprep.subr.mxu0 0.0
        %421 = vmatpush1.msra.mxu0 0.0
        %422 = vmatprep.subr.mxu0 0.0
        %423 = vmatpush1.msra.mxu0 0.0
        %424 = vmatprep.subr.mxu0 0.0
        %425 = vmatpush1.msra.mxu0 0.0
        %426 = vmatprep.subr.mxu0 0.0
        %427 = vmatpush1.msra.mxu0 0.0
        %428 = vmatprep.subr.mxu0 0.0
        %429 = vmatpush1.msra.mxu0 0.0
        %430 = vmatprep.subr.mxu0 0.0
        %431 = vmatpush1.msra.mxu0 0.0
        %432 = vmatprep.subr.mxu0 0.0
        %433 = vmatpush1.msra.mxu0 0.0
        %434 = vmatprep.subr.mxu0 0.0
        %435 = vmatpush1.msra.mxu0 0.0
        %436 = vmatprep.subr.mxu0 0.0
        %437 = vmatpush1.msra.mxu0 0.0
        %438 = vmatprep.subr.mxu0 0.0
        %439 = vmatpush1.msra.mxu0 0.0
        %440 = vmatprep.subr.mxu0 0.0
        %441 = vmatpush1.msra.mxu0 0.0
        %442 = vmatprep.subr.mxu0 0.0
        %443 = vmatpush1.msra.mxu0 0.0
        %444 = vmatprep.subr.mxu0 0.0
        %445 = vmatpush1.msra.mxu0 0.0
        %446 = vmatprep.subr.mxu0 0.0
        %447 = vmatpush1.msra.mxu0 0.0
        %448 = vmatprep.subr.mxu0 0.0
        %449 = vmatpush1.msra.mxu0 0.0
        %450 = vmatprep.subr.mxu0 0.0
        %451 = vmatpush1.msra.mxu0 0.0
        %452 = vmatprep.subr.mxu0 0.0
        %453 = vmatpush1.msra.mxu0 0.0
        %454 = vmatprep.subr.mxu0 0.0
        %455 = vmatpush1.msra.mxu0 0.0
        %456 = vmatprep.subr.mxu0 0.0
        %457 = vmatpush1.msra.mxu0 0.0
        %458 = vmatprep.subr.mxu0 0.0
        %459 = vmatpush1.msra.mxu0 0.0
        %460 = vmatprep.mubr.f32.mxu0 0.0
        %461 = vmatmul.mubr.f32.gmra.mrb[0].mxu0 %v394
        %v462 = vpop.f32.mrb[0].mxu0
        %v463 = vadd.f32 0.0, %v462
        %v464 = vpop.f32.mrb[0].mxu0
        %v465 = vadd.f32 0.0, %v464
        %466 = vdwg.mxu0
        %467 = vmatprep.subr.mxu0 %v332
        %468 = vmatpush1.msra.mxu0 %v331
        %469 = vmatprep.subr.mxu0 %v340
        %470 = vmatpush1.msra.mxu0 %v339
        %471 = vmatprep.subr.mxu0 %v348
        %472 = vmatpush1.msra.mxu0 %v347
        %473 = vmatprep.subr.mxu0 %v356
        %474 = vmatpush1.msra.mxu0 %v355
        %475 = vmatprep.subr.mxu0 0.0
        %476 = vmatpush1.msra.mxu0 0.0
        %477 = vmatprep.subr.mxu0 0.0
        %478 = vmatpush1.msra.mxu0 0.0
        %479 = vmatprep.subr.mxu0 0.0
        %480 = vmatpush1.msra.mxu0 0.0
        %481 = vmatprep.subr.mxu0 0.0
        %482 = vmatpush1.msra.mxu0 0.0
        %483 = vmatprep.subr.mxu0 0.0
        %484 = vmatpush1.msra.mxu0 0.0
        %485 = vmatprep.subr.mxu0 0.0
        %486 = vmatpush1.msra.mxu0 0.0
        %487 = vmatprep.subr.mxu0 0.0
        %488 = vmatpush1.msra.mxu0 0.0
        %489 = vmatprep.subr.mxu0 0.0
        %490 = vmatpush1.msra.mxu0 0.0
        %491 = vmatprep.subr.mxu0 0.0
        %492 = vmatpush1.msra.mxu0 0.0
        %493 = vmatprep.subr.mxu0 0.0
        %494 = vmatpush1.msra.mxu0 0.0
        %495 = vmatprep.subr.mxu0 0.0
        %496 = vmatpush1.msra.mxu0 0.0
        %497 = vmatprep.subr.mxu0 0.0
        %498 = vmatpush1.msra.mxu0 0.0
        %499 = vmatprep.subr.mxu0 0.0
        %500 = vmatpush1.msra.mxu0 0.0
        %501 = vmatprep.subr.mxu0 0.0
        %502 = vmatpush1.msra.mxu0 0.0
        %503 = vmatprep.subr.mxu0 0.0
        %504 = vmatpush1.msra.mxu0 0.0
        %505 = vmatprep.subr.mxu0 0.0
        %506 = vmatpush1.msra.mxu0 0.0
        %507 = vmatprep.subr.mxu0 0.0
        %508 = vmatpush1.msra.mxu0 0.0
        %509 = vmatprep.subr.mxu0 0.0
        %510 = vmatpush1.msra.mxu0 0.0
        %511 = vmatprep.subr.mxu0 0.0
        %512 = vmatpush1.msra.mxu0 0.0
        %513 = vmatprep.subr.mxu0 0.0
        %514 = vmatpush1.msra.mxu0 0.0
        %515 = vmatprep.subr.mxu0 0.0
        %516 = vmatpush1.msra.mxu0 0.0
        %517 = vmatprep.subr.mxu0 0.0
        %518 = vmatpush1.msra.mxu0 0.0
        %519 = vmatprep.subr.mxu0 0.0
        %520 = vmatpush1.msra.mxu0 0.0
        %521 = vmatprep.subr.mxu0 0.0
        %522 = vmatpush1.msra.mxu0 0.0
        %523 = vmatprep.subr.mxu0 0.0
        %524 = vmatpush1.msra.mxu0 0.0
        %525 = vmatprep.subr.mxu0 0.0
        %526 = vmatpush1.msra.mxu0 0.0
        %527 = vmatprep.subr.mxu0 0.0
        %528 = vmatpush1.msra.mxu0 0.0
        %529 = vmatprep.subr.mxu0 0.0
        %530 = vmatpush1.msra.mxu0 0.0
        %531 = vmatprep.mubr.f32.mxu0 0.0
        %532 = vmatmul.mubr.f32.gmra.mrb[0].mxu0 %v394
        %v533 = vpop.f32.mrb[0].mxu0
        %v534 = vadd.f32 0.0, %v533
        %v535 = vpop.f32.mrb[0].mxu0
        %v536 = vadd.f32 0.0, %v535
        %537 = vdwg.mxu0
        %538 = vmatprep.subr.mxu0 %v334
        %539 = vmatpush1.msra.mxu0 %v333
        %540 = vmatprep.subr.mxu0 %v342
        %541 = vmatpush1.msra.mxu0 %v341
        %542 = vmatprep.subr.mxu0 %v350
        %543 = vmatpush1.msra.mxu0 %v349
        %544 = vmatprep.subr.mxu0 %v358
        %545 = vmatpush1.msra.mxu0 %v357
        %546 = vmatprep.subr.mxu0 0.0
        %547 = vmatpush1.msra.mxu0 0.0
        %548 = vmatprep.subr.mxu0 0.0
        %549 = vmatpush1.msra.mxu0 0.0
        %550 = vmatprep.subr.mxu0 0.0
        %551 = vmatpush1.msra.mxu0 0.0
        %552 = vmatprep.subr.mxu0 0.0
        %553 = vmatpush1.msra.mxu0 0.0
        %554 = vmatprep.subr.mxu0 0.0
        %555 = vmatpush1.msra.mxu0 0.0
        %556 = vmatprep.subr.mxu0 0.0
        %557 = vmatpush1.msra.mxu0 0.0
        %558 = vmatprep.subr.mxu0 0.0
        %559 = vmatpush1.msra.mxu0 0.0
        %560 = vmatprep.subr.mxu0 0.0
        %561 = vmatpush1.msra.mxu0 0.0
        %562 = vmatprep.subr.mxu0 0.0
        %563 = vmatpush1.msra.mxu0 0.0
        %564 = vmatprep.subr.mxu0 0.0
        %565 = vmatpush1.msra.mxu0 0.0
        %566 = vmatprep.subr.mxu0 0.0
        %567 = vmatpush1.msra.mxu0 0.0
        %568 = vmatprep.subr.mxu0 0.0
        %569 = vmatpush1.msra.mxu0 0.0
        %570 = vmatprep.subr.mxu0 0.0
        %571 = vmatpush1.msra.mxu0 0.0
        %572 = vmatprep.subr.mxu0 0.0
        %573 = vmatpush1.msra.mxu0 0.0
        %574 = vmatprep.subr.mxu0 0.0
        %575 = vmatpush1.msra.mxu0 0.0
        %576 = vmatprep.subr.mxu0 0.0
        %577 = vmatpush1.msra.mxu0 0.0
        %578 = vmatprep.subr.mxu0 0.0
        %579 = vmatpush1.msra.mxu0 0.0
        %580 = vmatprep.subr.mxu0 0.0
        %581 = vmatpush1.msra.mxu0 0.0
        %582 = vmatprep.subr.mxu0 0.0
        %583 = vmatpush1.msra.mxu0 0.0
        %584 = vmatprep.subr.mxu0 0.0
        %585 = vmatpush1.msra.mxu0 0.0
        %586 = vmatprep.subr.mxu0 0.0
        %587 = vmatpush1.msra.mxu0 0.0
        %588 = vmatprep.subr.mxu0 0.0
        %589 = vmatpush1.msra.mxu0 0.0
        %590 = vmatprep.subr.mxu0 0.0
        %591 = vmatpush1.msra.mxu0 0.0
        %592 = vmatprep.subr.mxu0 0.0
        %593 = vmatpush1.msra.mxu0 0.0
        %594 = vmatprep.subr.mxu0 0.0
        %595 = vmatpush1.msra.mxu0 0.0
        %596 = vmatprep.subr.mxu0 0.0
        %597 = vmatpush1.msra.mxu0 0.0
        %598 = vmatprep.subr.mxu0 0.0
        %599 = vmatpush1.msra.mxu0 0.0
        %600 = vmatprep.subr.mxu0 0.0
        %601 = vmatpush1.msra.mxu0 0.0
        %602 = vmatprep.mubr.f32.mxu0 0.0
        %603 = vmatmul.mubr.f32.gmra.mrb[0].mxu0 %v394
        %v604 = vpop.f32.mrb[0].mxu0
        %v605 = vadd.f32 0.0, %v604
        %v606 = vpop.f32.mrb[0].mxu0
        %v607 = vadd.f32 0.0, %v606
        %608 = vdwg.mxu0
        %609 = vmatprep.subr.mxu0 %v336
        %610 = vmatpush1.msra.mxu0 %v335
        %611 = vmatprep.subr.mxu0 %v344
        %612 = vmatpush1.msra.mxu0 %v343
        %613 = vmatprep.subr.mxu0 %v352
        %614 = vmatpush1.msra.mxu0 %v351
        %615 = vmatprep.subr.mxu0 %v360
        %616 = vmatpush1.msra.mxu0 %v359
        %617 = vmatprep.subr.mxu0 0.0
        %618 = vmatpush1.msra.mxu0 0.0
        %619 = vmatprep.subr.mxu0 0.0
        %620 = vmatpush1.msra.mxu0 0.0
        %621 = vmatprep.subr.mxu0 0.0
        %622 = vmatpush1.msra.mxu0 0.0
        %623 = vmatprep.subr.mxu0 0.0
        %624 = vmatpush1.msra.mxu0 0.0
        %625 = vmatprep.subr.mxu0 0.0
        %626 = vmatpush1.msra.mxu0 0.0
        %627 = vmatprep.subr.mxu0 0.0
        %628 = vmatpush1.msra.mxu0 0.0
        %629 = vmatprep.subr.mxu0 0.0
        %630 = vmatpush1.msra.mxu0 0.0
        %631 = vmatprep.subr.mxu0 0.0
        %632 = vmatpush1.msra.mxu0 0.0
        %633 = vmatprep.subr.mxu0 0.0
        %634 = vmatpush1.msra.mxu0 0.0
        %635 = vmatprep.subr.mxu0 0.0
        %636 = vmatpush1.msra.mxu0 0.0
        %637 = vmatprep.subr.mxu0 0.0
        %638 = vmatpush1.msra.mxu0 0.0
        %639 = vmatprep.subr.mxu0 0.0
        %640 = vmatpush1.msra.mxu0 0.0
        %641 = vmatprep.subr.mxu0 0.0
        %642 = vmatpush1.msra.mxu0 0.0
        %643 = vmatprep.subr.mxu0 0.0
        %644 = vmatpush1.msra.mxu0 0.0
        %645 = vmatprep.subr.mxu0 0.0
        %646 = vmatpush1.msra.mxu0 0.0
        %647 = vmatprep.subr.mxu0 0.0
        %648 = vmatpush1.msra.mxu0 0.0
        %649 = vmatprep.subr.mxu0 0.0
        %650 = vmatpush1.msra.mxu0 0.0
        %651 = vmatprep.subr.mxu0 0.0
        %652 = vmatpush1.msra.mxu0 0.0
        %653 = vmatprep.subr.mxu0 0.0
        %654 = vmatpush1.msra.mxu0 0.0
        %655 = vmatprep.subr.mxu0 0.0
        %656 = vmatpush1.msra.mxu0 0.0
        %657 = vmatprep.subr.mxu0 0.0
        %658 = vmatpush1.msra.mxu0 0.0
        %659 = vmatprep.subr.mxu0 0.0
        %660 = vmatpush1.msra.mxu0 0.0
        %661 = vmatprep.subr.mxu0 0.0
        %662 = vmatpush1.msra.mxu0 0.0
        %663 = vmatprep.subr.mxu0 0.0
        %664 = vmatpush1.msra.mxu0 0.0
        %665 = vmatprep.subr.mxu0 0.0
        %666 = vmatpush1.msra.mxu0 0.0
        %667 = vmatprep.subr.mxu0 0.0
        %668 = vmatpush1.msra.mxu0 0.0
        %669 = vmatprep.subr.mxu0 0.0
        %670 = vmatpush1.msra.mxu0 0.0
        %671 = vmatprep.subr.mxu0 0.0
        %672 = vmatpush1.msra.mxu0 0.0
        %673 = vmatprep.mubr.f32.mxu0 0.0
        %674 = vmatmul.mubr.f32.gmra.mrb[0].mxu0 %v394
        %v675 = vpop.f32.mrb[0].mxu0
        %v676 = vadd.f32 0.0, %v675
        %v677 = vpop.f32.mrb[0].mxu0
        %v678 = vadd.f32 0.0, %v677
        %679 = vdwg.mxu0
        %680 = vmatprep.subr.mxu0 %v362
        %681 = vmatpush1.msra.mxu0 %v361
        %682 = vmatprep.subr.mxu0 %v370
        %683 = vmatpush1.msra.mxu0 %v369
        %684 = vmatprep.subr.mxu0 %v378
        %685 = vmatpush1.msra.mxu0 %v377
        %686 = vmatprep.subr.mxu0 %v386
        %687 = vmatpush1.msra.mxu0 %v385
        %688 = vmatprep.subr.mxu0 0.0
        %689 = vmatpush1.msra.mxu0 0.0
        %690 = vmatprep.subr.mxu0 0.0
        %691 = vmatpush1.msra.mxu0 0.0
        %692 = vmatprep.subr.mxu0 0.0
        %693 = vmatpush1.msra.mxu0 0.0
        %694 = vmatprep.subr.mxu0 0.0
        %695 = vmatpush1.msra.mxu0 0.0
        %696 = vmatprep.subr.mxu0 0.0
        %697 = vmatpush1.msra.mxu0 0.0
        %698 = vmatprep.subr.mxu0 0.0
        %699 = vmatpush1.msra.mxu0 0.0
        %700 = vmatprep.subr.mxu0 0.0
        %701 = vmatpush1.msra.mxu0 0.0
        %702 = vmatprep.subr.mxu0 0.0
        %703 = vmatpush1.msra.mxu0 0.0
        %704 = vmatprep.subr.mxu0 0.0
        %705 = vmatpush1.msra.mxu0 0.0
        %706 = vmatprep.subr.mxu0 0.0
        %707 = vmatpush1.msra.mxu0 0.0
        %708 = vmatprep.subr.mxu0 0.0
        %709 = vmatpush1.msra.mxu0 0.0
        %710 = vmatprep.subr.mxu0 0.0
        %711 = vmatpush1.msra.mxu0 0.0
        %712 = vmatprep.subr.mxu0 0.0
        %713 = vmatpush1.msra.mxu0 0.0
        %714 = vmatprep.subr.mxu0 0.0
        %715 = vmatpush1.msra.mxu0 0.0
        %716 = vmatprep.subr.mxu0 0.0
        %717 = vmatpush1.msra.mxu0 0.0
        %718 = vmatprep.subr.mxu0 0.0
        %719 = vmatpush1.msra.mxu0 0.0
        %720 = vmatprep.subr.mxu0 0.0
        %721 = vmatpush1.msra.mxu0 0.0
        %722 = vmatprep.subr.mxu0 0.0
        %723 = vmatpush1.msra.mxu0 0.0
        %724 = vmatprep.subr.mxu0 0.0
        %725 = vmatpush1.msra.mxu0 0.0
        %726 = vmatprep.subr.mxu0 0.0
        %727 = vmatpush1.msra.mxu0 0.0
        %728 = vmatprep.subr.mxu0 0.0
        %729 = vmatpush1.msra.mxu0 0.0
        %730 = vmatprep.subr.mxu0 0.0
        %731 = vmatpush1.msra.mxu0 0.0
        %732 = vmatprep.subr.mxu0 0.0
        %733 = vmatpush1.msra.mxu0 0.0
        %734 = vmatprep.subr.mxu0 0.0
        %735 = vmatpush1.msra.mxu0 0.0
        %736 = vmatprep.subr.mxu0 0.0
        %737 = vmatpush1.msra.mxu0 0.0
        %738 = vmatprep.subr.mxu0 0.0
        %739 = vmatpush1.msra.mxu0 0.0
        %740 = vmatprep.subr.mxu0 0.0
        %741 = vmatpush1.msra.mxu0 0.0
        %742 = vmatprep.subr.mxu0 0.0
        %743 = vmatpush1.msra.mxu0 0.0
        %744 = vmatprep.mubr.f32.mxu0 0.0
        %745 = vmatmul.mubr.f32.gmra.mrb[0].mxu0 %v394
        %v746 = vpop.f32.mrb[0].mxu0
        %v747 = vadd.f32 0.0, %v746
        %v748 = vpop.f32.mrb[0].mxu0
        %v749 = vadd.f32 0.0, %v748
        %750 = vdwg.mxu0
        %751 = vmatprep.subr.mxu0 %v364
        %752 = vmatpush1.msra.mxu0 %v363
        %753 = vmatprep.subr.mxu0 %v372
        %754 = vmatpush1.msra.mxu0 %v371
        %755 = vmatprep.subr.mxu0 %v380
        %756 = vmatpush1.msra.mxu0 %v379
        %757 = vmatprep.subr.mxu0 %v388
        %758 = vmatpush1.msra.mxu0 %v387
        %759 = vmatprep.subr.mxu0 0.0
        %760 = vmatpush1.msra.mxu0 0.0
        %761 = vmatprep.subr.mxu0 0.0
        %762 = vmatpush1.msra.mxu0 0.0
        %763 = vmatprep.subr.mxu0 0.0
        %764 = vmatpush1.msra.mxu0 0.0
        %765 = vmatprep.subr.mxu0 0.0
        %766 = vmatpush1.msra.mxu0 0.0
        %767 = vmatprep.subr.mxu0 0.0
        %768 = vmatpush1.msra.mxu0 0.0
        %769 = vmatprep.subr.mxu0 0.0
        %770 = vmatpush1.msra.mxu0 0.0
        %771 = vmatprep.subr.mxu0 0.0
        %772 = vmatpush1.msra.mxu0 0.0
        %773 = vmatprep.subr.mxu0 0.0
        %774 = vmatpush1.msra.mxu0 0.0
        %775 = vmatprep.subr.mxu0 0.0
        %776 = vmatpush1.msra.mxu0 0.0
        %777 = vmatprep.subr.mxu0 0.0
        %778 = vmatpush1.msra.mxu0 0.0
        %779 = vmatprep.subr.mxu0 0.0
        %780 = vmatpush1.msra.mxu0 0.0
        %781 = vmatprep.subr.mxu0 0.0
        %782 = vmatpush1.msra.mxu0 0.0
        %783 = vmatprep.subr.mxu0 0.0
        %784 = vmatpush1.msra.mxu0 0.0
        %785 = vmatprep.subr.mxu0 0.0
        %786 = vmatpush1.msra.mxu0 0.0
        %787 = vmatprep.subr.mxu0 0.0
        %788 = vmatpush1.msra.mxu0 0.0
        %789 = vmatprep.subr.mxu0 0.0
        %790 = vmatpush1.msra.mxu0 0.0
        %791 = vmatprep.subr.mxu0 0.0
        %792 = vmatpush1.msra.mxu0 0.0
        %793 = vmatprep.subr.mxu0 0.0
        %794 = vmatpush1.msra.mxu0 0.0
        %795 = vmatprep.subr.mxu0 0.0
        %796 = vmatpush1.msra.mxu0 0.0
        %797 = vmatprep.subr.mxu0 0.0
        %798 = vmatpush1.msra.mxu0 0.0
        %799 = vmatprep.subr.mxu0 0.0
        %800 = vmatpush1.msra.mxu0 0.0
        %801 = vmatprep.subr.mxu0 0.0
        %802 = vmatpush1.msra.mxu0 0.0
        %803 = vmatprep.subr.mxu0 0.0
        %804 = vmatpush1.msra.mxu0 0.0
        %805 = vmatprep.subr.mxu0 0.0
        %806 = vmatpush1.msra.mxu0 0.0
        %807 = vmatprep.subr.mxu0 0.0
        %808 = vmatpush1.msra.mxu0 0.0
        %809 = vmatprep.subr.mxu0 0.0
        %810 = vmatpush1.msra.mxu0 0.0
        %811 = vmatprep.subr.mxu0 0.0
        %812 = vmatpush1.msra.mxu0 0.0
        %813 = vmatprep.subr.mxu0 0.0
        %814 = vmatpush1.msra.mxu0 0.0
        %815 = vmatprep.mubr.f32.mxu0 0.0
        %816 = vmatmul.mubr.f32.gmra.mrb[0].mxu0 %v394
        %v817 = vpop.f32.mrb[0].mxu0
        %v818 = vadd.f32 0.0, %v817
        %v819 = vpop.f32.mrb[0].mxu0
        %v820 = vadd.f32 0.0, %v819
        %821 = vdwg.mxu0
        %822 = vmatprep.subr.mxu0 %v366
        %823 = vmatpush1.msra.mxu0 %v365
        %824 = vmatprep.subr.mxu0 %v374
        %825 = vmatpush1.msra.mxu0 %v373
        %826 = vmatprep.subr.mxu0 %v382
        %827 = vmatpush1.msra.mxu0 %v381
        %828 = vmatprep.subr.mxu0 %v390
        %829 = vmatpush1.msra.mxu0 %v389
        %830 = vmatprep.subr.mxu0 0.0
        %831 = vmatpush1.msra.mxu0 0.0
        %832 = vmatprep.subr.mxu0 0.0
        %833 = vmatpush1.msra.mxu0 0.0
        %834 = vmatprep.subr.mxu0 0.0
        %835 = vmatpush1.msra.mxu0 0.0
        %836 = vmatprep.subr.mxu0 0.0
        %837 = vmatpush1.msra.mxu0 0.0
        %838 = vmatprep.subr.mxu0 0.0
        %839 = vmatpush1.msra.mxu0 0.0
        %840 = vmatprep.subr.mxu0 0.0
        %841 = vmatpush1.msra.mxu0 0.0
        %842 = vmatprep.subr.mxu0 0.0
        %843 = vmatpush1.msra.mxu0 0.0
        %844 = vmatprep.subr.mxu0 0.0
        %845 = vmatpush1.msra.mxu0 0.0
        %846 = vmatprep.subr.mxu0 0.0
        %847 = vmatpush1.msra.mxu0 0.0
        %848 = vmatprep.subr.mxu0 0.0
        %849 = vmatpush1.msra.mxu0 0.0
        %850 = vmatprep.subr.mxu0 0.0
        %851 = vmatpush1.msra.mxu0 0.0
        %852 = vmatprep.subr.mxu0 0.0
        %853 = vmatpush1.msra.mxu0 0.0
        %854 = vmatprep.subr.mxu0 0.0
        %855 = vmatpush1.msra.mxu0 0.0
        %856 = vmatprep.subr.mxu0 0.0
        %857 = vmatpush1.msra.mxu0 0.0
        %858 = vmatprep.subr.mxu0 0.0
        %859 = vmatpush1.msra.mxu0 0.0
        %860 = vmatprep.subr.mxu0 0.0
        %861 = vmatpush1.msra.mxu0 0.0
        %862 = vmatprep.subr.mxu0 0.0
        %863 = vmatpush1.msra.mxu0 0.0
        %864 = vmatprep.subr.mxu0 0.0
        %865 = vmatpush1.msra.mxu0 0.0
        %866 = vmatprep.subr.mxu0 0.0
        %867 = vmatpush1.msra.mxu0 0.0
        %868 = vmatprep.subr.mxu0 0.0
        %869 = vmatpush1.msra.mxu0 0.0
        %870 = vmatprep.subr.mxu0 0.0
        %871 = vmatpush1.msra.mxu0 0.0
        %872 = vmatprep.subr.mxu0 0.0
        %873 = vmatpush1.msra.mxu0 0.0
        %874 = vmatprep.subr.mxu0 0.0
        %875 = vmatpush1.msra.mxu0 0.0
        %876 = vmatprep.subr.mxu0 0.0
        %877 = vmatpush1.msra.mxu0 0.0
        %878 = vmatprep.subr.mxu0 0.0
        %879 = vmatpush1.msra.mxu0 0.0
        %880 = vmatprep.subr.mxu0 0.0
        %881 = vmatpush1.msra.mxu0 0.0
        %882 = vmatprep.subr.mxu0 0.0
        %883 = vmatpush1.msra.mxu0 0.0
        %884 = vmatprep.subr.mxu0 0.0
        %885 = vmatpush1.msra.mxu0 0.0
        %886 = vmatprep.mubr.f32.mxu0 0.0
        %887 = vmatmul.mubr.f32.gmra.mrb[0].mxu0 %v394
        %v888 = vpop.f32.mrb[0].mxu0
        %v889 = vadd.f32 0.0, %v888
        %v890 = vpop.f32.mrb[0].mxu0
        %v891 = vadd.f32 0.0, %v890
        %892 = vdwg.mxu0
        %893 = vmatprep.subr.mxu0 %v368
        %894 = vmatpush1.msra.mxu0 %v367
        %895 = vmatprep.subr.mxu0 %v376
        %896 = vmatpush1.msra.mxu0 %v375
        %897 = vmatprep.subr.mxu0 %v384
        %898 = vmatpush1.msra.mxu0 %v383
        %899 = vmatprep.subr.mxu0 %v392
        %900 = vmatpush1.msra.mxu0 %v391
        %901 = vmatprep.subr.mxu0 0.0
        %902 = vmatpush1.msra.mxu0 0.0
        %903 = vmatprep.subr.mxu0 0.0
        %904 = vmatpush1.msra.mxu0 0.0
        %905 = vmatprep.subr.mxu0 0.0
        %906 = vmatpush1.msra.mxu0 0.0
        %907 = vmatprep.subr.mxu0 0.0
        %908 = vmatpush1.msra.mxu0 0.0
        %909 = vmatprep.subr.mxu0 0.0
        %910 = vmatpush1.msra.mxu0 0.0
        %911 = vmatprep.subr.mxu0 0.0
        %912 = vmatpush1.msra.mxu0 0.0
        %913 = vmatprep.subr.mxu0 0.0
        %914 = vmatpush1.msra.mxu0 0.0
        %915 = vmatprep.subr.mxu0 0.0
        %916 = vmatpush1.msra.mxu0 0.0
        %917 = vmatprep.subr.mxu0 0.0
        %918 = vmatpush1.msra.mxu0 0.0
        %919 = vmatprep.subr.mxu0 0.0
        %920 = vmatpush1.msra.mxu0 0.0
        %921 = vmatprep.subr.mxu0 0.0
        %922 = vmatpush1.msra.mxu0 0.0
        %923 = vmatprep.subr.mxu0 0.0
        %924 = vmatpush1.msra.mxu0 0.0
        %925 = vmatprep.subr.mxu0 0.0
        %926 = vmatpush1.msra.mxu0 0.0
        %927 = vmatprep.subr.mxu0 0.0
        %928 = vmatpush1.msra.mxu0 0.0
        %929 = vmatprep.subr.mxu0 0.0
        %930 = vmatpush1.msra.mxu0 0.0
        %931 = vmatprep.subr.mxu0 0.0
        %932 = vmatpush1.msra.mxu0 0.0
        %933 = vmatprep.subr.mxu0 0.0
        %934 = vmatpush1.msra.mxu0 0.0
        %935 = vmatprep.subr.mxu0 0.0
        %936 = vmatpush1.msra.mxu0 0.0
        %937 = vmatprep.subr.mxu0 0.0
        %938 = vmatpush1.msra.mxu0 0.0
        %939 = vmatprep.subr.mxu0 0.0
        %940 = vmatpush1.msra.mxu0 0.0
        %941 = vmatprep.subr.mxu0 0.0
        %942 = vmatpush1.msra.mxu0 0.0
        %943 = vmatprep.subr.mxu0 0.0
        %944 = vmatpush1.msra.mxu0 0.0
        %945 = vmatprep.subr.mxu0 0.0
        %946 = vmatpush1.msra.mxu0 0.0
        %947 = vmatprep.subr.mxu0 0.0
        %948 = vmatpush1.msra.mxu0 0.0
        %949 = vmatprep.subr.mxu0 0.0
        %950 = vmatpush1.msra.mxu0 0.0
        %951 = vmatprep.subr.mxu0 0.0
        %952 = vmatpush1.msra.mxu0 0.0
        %953 = vmatprep.subr.mxu0 0.0
        %954 = vmatpush1.msra.mxu0 0.0
        %955 = vmatprep.subr.mxu0 0.0
        %956 = vmatpush1.msra.mxu0 0.0
        %957 = vmatprep.mubr.f32.mxu0 0.0
        %958 = vmatmul.mubr.f32.gmra.mrb[0].mxu0 %v394
        %v959 = vpop.f32.mrb[0].mxu0
        %v960 = vadd.f32 0.0, %v959
        %v961 = vpop.f32.mrb[0].mxu0
        %v962 = vadd.f32 0.0, %v961
        %963 = vdwg.mxu0
        %v964 = vmul.f32 %v321, %v747
        %v965 = vmul.f32 %v322, %v749
        %v966 = vmul.f32 %v323, %v818
        %v967 = vmul.f32 %v324, %v820
        %v968 = vmul.f32 %v325, %v889
        %v969 = vmul.f32 %v326, %v891
        %v970 = vmul.f32 %v327, %v960
        %v971 = vmul.f32 %v328, %v962
        %v972 = vld [vmem:[%s4] sm:$0xff]
        %v973 = vld [vmem:[%s4 + $0x8] sm:$0xff]
        %v974 = vld [vmem:[%s4 + $0x10] sm:$0xff]
        %v975 = vld [vmem:[%s4 + $0x18] sm:$0xff]
        %v976 = vld [vmem:[%s4 + $0x20] sm:$0xff]
        %v977 = vld [vmem:[%s4 + $0x28] sm:$0xff]
        %v978 = vld [vmem:[%s4 + $0x30] sm:$0xff]
        %v979 = vld [vmem:[%s4 + $0x38] sm:$0xff]
        %v980 = vld [vmem:[%s4 + $0x40] sm:$0xff]
        %v981 = vld [vmem:[%s4 + $0x48] sm:$0xff]
        %v982 = vld [vmem:[%s4 + $0x50] sm:$0xff]
        %v983 = vld [vmem:[%s4 + $0x58] sm:$0xff]
        %v984 = vld [vmem:[%s4 + $0x60] sm:$0xff]
        %v985 = vld [vmem:[%s4 + $0x68] sm:$0xff]
        %v986 = vld [vmem:[%s4 + $0x70] sm:$0xff]
        %v987 = vld [vmem:[%s4 + $0x78] sm:$0xff]
        %v988 = vld [vmem:[%s4 + $0x80] sm:$0xff]
        %v989 = vld [vmem:[%s4 + $0x88] sm:$0xff]
        %v990 = vld [vmem:[%s4 + $0x90] sm:$0xff]
        %v991 = vld [vmem:[%s4 + $0x98] sm:$0xff]
        %v992 = vld [vmem:[%s4 + $0xa0] sm:$0xff]
        %v993 = vld [vmem:[%s4 + $0xa8] sm:$0xff]
        %v994 = vld [vmem:[%s4 + $0xb0] sm:$0xff]
        %v995 = vld [vmem:[%s4 + $0xb8] sm:$0xff]
        %v996 = vld [vmem:[%s4 + $0xc0] sm:$0xff]
        %v997 = vld [vmem:[%s4 + $0xc8] sm:$0xff]
        %v998 = vld [vmem:[%s4 + $0xd0] sm:$0xff]
        %v999 = vld [vmem:[%s4 + $0xd8] sm:$0xff]
        %v1000 = vld [vmem:[%s4 + $0xe0] sm:$0xff]
        %v1001 = vld [vmem:[%s4 + $0xe8] sm:$0xff]
        %v1002 = vld [vmem:[%s4 + $0xf0] sm:$0xff]
        %v1003 = vld [vmem:[%s4 + $0xf8] sm:$0xff]
        %v1004 = vld [vmem:[%s4 + $0x100] sm:$0xff]
        %v1005 = vld [vmem:[%s4 + $0x108] sm:$0xff]
        %v1006 = vld [vmem:[%s4 + $0x110] sm:$0xff]
        %v1007 = vld [vmem:[%s4 + $0x118] sm:$0xff]
        %v1008 = vld [vmem:[%s4 + $0x120] sm:$0xff]
        %v1009 = vld [vmem:[%s4 + $0x128] sm:$0xff]
        %v1010 = vld [vmem:[%s4 + $0x130] sm:$0xff]
        %v1011 = vld [vmem:[%s4 + $0x138] sm:$0xff]
        %v1012 = vld [vmem:[%s4 + $0x140] sm:$0xff]
        %v1013 = vld [vmem:[%s4 + $0x148] sm:$0xff]
        %v1014 = vld [vmem:[%s4 + $0x150] sm:$0xff]
        %v1015 = vld [vmem:[%s4 + $0x158] sm:$0xff]
        %v1016 = vld [vmem:[%s4 + $0x160] sm:$0xff]
        %v1017 = vld [vmem:[%s4 + $0x168] sm:$0xff]
        %v1018 = vld [vmem:[%s4 + $0x170] sm:$0xff]
        %v1019 = vld [vmem:[%s4 + $0x178] sm:$0xff]
        %v1020 = vld [vmem:[%s4 + $0x180] sm:$0xff]
        %v1021 = vld [vmem:[%s4 + $0x188] sm:$0xff]
        %v1022 = vld [vmem:[%s4 + $0x190] sm:$0xff]
        %v1023 = vld [vmem:[%s4 + $0x198] sm:$0xff]
        %v1024 = vld [vmem:[%s4 + $0x1a0] sm:$0xff]
        %v1025 = vld [vmem:[%s4 + $0x1a8] sm:$0xff]
        %v1026 = vld [vmem:[%s4 + $0x1b0] sm:$0xff]
        %v1027 = vld [vmem:[%s4 + $0x1b8] sm:$0xff]
        %v1028 = vld [vmem:[%s4 + $0x1c0] sm:$0xff]
        %v1029 = vld [vmem:[%s4 + $0x1c8] sm:$0xff]
        %v1030 = vld [vmem:[%s4 + $0x1d0] sm:$0xff]
        %v1031 = vld [vmem:[%s4 + $0x1d8] sm:$0xff]
        %v1032 = vld [vmem:[%s4 + $0x1e0] sm:$0xff]
        %v1033 = vld [vmem:[%s4 + $0x1e8] sm:$0xff]
        %v1034 = vld [vmem:[%s4 + $0x1f0] sm:$0xff]
        %v1035 = vld [vmem:[%s4 + $0x1f8] sm:$0xff]
        %v1036 = vld [vmem:[%s4 + $0x200] sm:$0xff]
        %v1037 = vld [vmem:[%s4 + $0x208] sm:$0xff]
        %v1038 = vld [vmem:[%s4 + $0x210] sm:$0xff]
        %v1039 = vld [vmem:[%s4 + $0x218] sm:$0xff]
        %v1040 = vld [vmem:[%s4 + $0x220] sm:$0xff]
        %v1041 = vld [vmem:[%s4 + $0x228] sm:$0xff]
        %v1042 = vld [vmem:[%s4 + $0x230] sm:$0xff]
        %v1043 = vld [vmem:[%s4 + $0x238] sm:$0xff]
        %v1044 = vld [vmem:[%s4 + $0x240] sm:$0xff]
        %v1045 = vld [vmem:[%s4 + $0x248] sm:$0xff]
        %v1046 = vld [vmem:[%s4 + $0x250] sm:$0xff]
        %v1047 = vld [vmem:[%s4 + $0x258] sm:$0xff]
        %v1048 = vld [vmem:[%s4 + $0x260] sm:$0xff]
        %v1049 = vld [vmem:[%s4 + $0x268] sm:$0xff]
        %v1050 = vld [vmem:[%s4 + $0x270] sm:$0xff]
        %v1051 = vld [vmem:[%s4 + $0x278] sm:$0xff]
        %v1052 = vld [vmem:[%s4 + $0x280] sm:$0xff]
        %v1053 = vld [vmem:[%s4 + $0x288] sm:$0xff]
        %v1054 = vld [vmem:[%s4 + $0x290] sm:$0xff]
        %v1055 = vld [vmem:[%s4 + $0x298] sm:$0xff]
        %v1056 = vld [vmem:[%s4 + $0x2a0] sm:$0xff]
        %v1057 = vld [vmem:[%s4 + $0x2a8] sm:$0xff]
        %v1058 = vld [vmem:[%s4 + $0x2b0] sm:$0xff]
        %v1059 = vld [vmem:[%s4 + $0x2b8] sm:$0xff]
        %v1060 = vld [vmem:[%s4 + $0x2c0] sm:$0xff]
        %v1061 = vld [vmem:[%s4 + $0x2c8] sm:$0xff]
        %v1062 = vld [vmem:[%s4 + $0x2d0] sm:$0xff]
        %v1063 = vld [vmem:[%s4 + $0x2d8] sm:$0xff]
        %v1064 = vld [vmem:[%s4 + $0x2e0] sm:$0xff]
        %v1065 = vld [vmem:[%s4 + $0x2e8] sm:$0xff]
        %v1066 = vld [vmem:[%s4 + $0x2f0] sm:$0xff]
        %v1067 = vld [vmem:[%s4 + $0x2f8] sm:$0xff]
        %v1068 = vld [vmem:[%s4 + $0x300] sm:$0xff]
        %v1069 = vld [vmem:[%s4 + $0x308] sm:$0xff]
        %v1070 = vld [vmem:[%s4 + $0x310] sm:$0xff]
        %v1071 = vld [vmem:[%s4 + $0x318] sm:$0xff]
        %v1072 = vld [vmem:[%s4 + $0x320] sm:$0xff]
        %v1073 = vld [vmem:[%s4 + $0x328] sm:$0xff]
        %v1074 = vld [vmem:[%s4 + $0x330] sm:$0xff]
        %v1075 = vld [vmem:[%s4 + $0x338] sm:$0xff]
        %v1076 = vld [vmem:[%s4 + $0x340] sm:$0xff]
        %v1077 = vld [vmem:[%s4 + $0x348] sm:$0xff]
        %v1078 = vld [vmem:[%s4 + $0x350] sm:$0xff]
        %v1079 = vld [vmem:[%s4 + $0x358] sm:$0xff]
        %v1080 = vld [vmem:[%s4 + $0x360] sm:$0xff]
        %v1081 = vld [vmem:[%s4 + $0x368] sm:$0xff]
        %v1082 = vld [vmem:[%s4 + $0x370] sm:$0xff]
        %v1083 = vld [vmem:[%s4 + $0x378] sm:$0xff]
        %v1084 = vld [vmem:[%s4 + $0x380] sm:$0xff]
        %v1085 = vld [vmem:[%s4 + $0x388] sm:$0xff]
        %v1086 = vld [vmem:[%s4 + $0x390] sm:$0xff]
        %v1087 = vld [vmem:[%s4 + $0x398] sm:$0xff]
        %v1088 = vld [vmem:[%s4 + $0x3a0] sm:$0xff]
        %v1089 = vld [vmem:[%s4 + $0x3a8] sm:$0xff]
        %v1090 = vld [vmem:[%s4 + $0x3b0] sm:$0xff]
        %v1091 = vld [vmem:[%s4 + $0x3b8] sm:$0xff]
        %v1092 = vld [vmem:[%s4 + $0x3c0] sm:$0xff]
        %v1093 = vld [vmem:[%s4 + $0x3c8] sm:$0xff]
        %v1094 = vld [vmem:[%s4 + $0x3d0] sm:$0xff]
        %v1095 = vld [vmem:[%s4 + $0x3d8] sm:$0xff]
        %v1096 = vld [vmem:[%s4 + $0x3e0] sm:$0xff]
        %v1097 = vld [vmem:[%s4 + $0x3e8] sm:$0xff]
        %v1098 = vld [vmem:[%s4 + $0x3f0] sm:$0xff]
        %v1099 = vld [vmem:[%s4 + $0x3f8] sm:$0xff]
        %1100 = vmatprep.subr.mxu0 0.0
        %1101 = vmatpush1.msra.mxu0 %v972
        %1102 = vmatprep.subr.mxu0 0.0
        %1103 = vmatpush1.msra.mxu0 %v973
        %1104 = vmatprep.subr.mxu0 0.0
        %1105 = vmatpush1.msra.mxu0 %v974
        %1106 = vmatprep.subr.mxu0 0.0
        %1107 = vmatpush1.msra.mxu0 %v975
        %1108 = vmatprep.subr.mxu0 0.0
        %1109 = vmatpush1.msra.mxu0 %v976
        %1110 = vmatprep.subr.mxu0 0.0
        %1111 = vmatpush1.msra.mxu0 %v977
        %1112 = vmatprep.subr.mxu0 0.0
        %1113 = vmatpush1.msra.mxu0 %v978
        %1114 = vmatprep.subr.mxu0 0.0
        %1115 = vmatpush1.msra.mxu0 %v979
        %1116 = vmatprep.subr.mxu0 0.0
        %1117 = vmatpush1.msra.mxu0 %v980
        %1118 = vmatprep.subr.mxu0 0.0
        %1119 = vmatpush1.msra.mxu0 %v981
        %1120 = vmatprep.subr.mxu0 0.0
        %1121 = vmatpush1.msra.mxu0 %v982
        %1122 = vmatprep.subr.mxu0 0.0
        %1123 = vmatpush1.msra.mxu0 %v983
        %1124 = vmatprep.subr.mxu0 0.0
        %1125 = vmatpush1.msra.mxu0 %v984
        %1126 = vmatprep.subr.mxu0 0.0
        %1127 = vmatpush1.msra.mxu0 %v985
        %1128 = vmatprep.subr.mxu0 0.0
        %1129 = vmatpush1.msra.mxu0 %v986
        %1130 = vmatprep.subr.mxu0 0.0
        %1131 = vmatpush1.msra.mxu0 %v987
        %1132 = vmatprep.subr.mxu0 0.0
        %1133 = vmatpush1.msra.mxu0 %v988
        %1134 = vmatprep.subr.mxu0 0.0
        %1135 = vmatpush1.msra.mxu0 %v989
        %1136 = vmatprep.subr.mxu0 0.0
        %1137 = vmatpush1.msra.mxu0 %v990
        %1138 = vmatprep.subr.mxu0 0.0
        %1139 = vmatpush1.msra.mxu0 %v991
        %1140 = vmatprep.subr.mxu0 0.0
        %1141 = vmatpush1.msra.mxu0 %v992
        %1142 = vmatprep.subr.mxu0 0.0
        %1143 = vmatpush1.msra.mxu0 %v993
        %1144 = vmatprep.subr.mxu0 0.0
        %1145 = vmatpush1.msra.mxu0 %v994
        %1146 = vmatprep.subr.mxu0 0.0
        %1147 = vmatpush1.msra.mxu0 %v995
        %1148 = vmatprep.subr.mxu0 0.0
        %1149 = vmatpush1.msra.mxu0 %v996
        %1150 = vmatprep.subr.mxu0 0.0
        %1151 = vmatpush1.msra.mxu0 %v997
        %1152 = vmatprep.subr.mxu0 0.0
        %1153 = vmatpush1.msra.mxu0 %v998
        %1154 = vmatprep.subr.mxu0 0.0
        %1155 = vmatpush1.msra.mxu0 %v999
        %1156 = vmatprep.subr.mxu0 0.0
        %1157 = vmatpush1.msra.mxu0 %v1000
        %1158 = vmatprep.subr.mxu0 0.0
        %1159 = vmatpush1.msra.mxu0 %v1001
        %1160 = vmatprep.subr.mxu0 0.0
        %1161 = vmatpush1.msra.mxu0 %v1002
        %1162 = vmatprep.subr.mxu0 0.0
        %1163 = vmatpush1.msra.mxu0 %v1003
        %1164 = vmatprep.mubr.f32.mxu0 %v965
        %1165 = vmatmul.mubr.f32.gmra.mrb[0].mxu0 %v964
        %v1166 = vpop.f32.mrb[0].mxu0
        %v1167 = vadd.f32 0.0, %v1166
        %v1168 = vpop.f32.mrb[0].mxu0
        %1169 = vdwg.mxu0
        %1170 = vmatprep.subr.mxu0 0.0
        %1171 = vmatpush1.msra.mxu0 %v1004
        %1172 = vmatprep.subr.mxu0 0.0
        %1173 = vmatpush1.msra.mxu0 %v1005
        %1174 = vmatprep.subr.mxu0 0.0
        %1175 = vmatpush1.msra.mxu0 %v1006
        %1176 = vmatprep.subr.mxu0 0.0
        %1177 = vmatpush1.msra.mxu0 %v1007
        %1178 = vmatprep.subr.mxu0 0.0
        %1179 = vmatpush1.msra.mxu0 %v1008
        %1180 = vmatprep.subr.mxu0 0.0
        %1181 = vmatpush1.msra.mxu0 %v1009
        %1182 = vmatprep.subr.mxu0 0.0
        %1183 = vmatpush1.msra.mxu0 %v1010
        %1184 = vmatprep.subr.mxu0 0.0
        %1185 = vmatpush1.msra.mxu0 %v1011
        %1186 = vmatprep.subr.mxu0 0.0
        %1187 = vmatpush1.msra.mxu0 %v1012
        %1188 = vmatprep.subr.mxu0 0.0
        %1189 = vmatpush1.msra.mxu0 %v1013
        %1190 = vmatprep.subr.mxu0 0.0
        %1191 = vmatpush1.msra.mxu0 %v1014
        %1192 = vmatprep.subr.mxu0 0.0
        %1193 = vmatpush1.msra.mxu0 %v1015
        %1194 = vmatprep.subr.mxu0 0.0
        %1195 = vmatpush1.msra.mxu0 %v1016
        %1196 = vmatprep.subr.mxu0 0.0
        %1197 = vmatpush1.msra.mxu0 %v1017
        %1198 = vmatprep.subr.mxu0 0.0
        %1199 = vmatpush1.msra.mxu0 %v1018
        %1200 = vmatprep.subr.mxu0 0.0
        %1201 = vmatpush1.msra.mxu0 %v1019
        %1202 = vmatprep.subr.mxu0 0.0
        %1203 = vmatpush1.msra.mxu0 %v1020
        %1204 = vmatprep.subr.mxu0 0.0
        %1205 = vmatpush1.msra.mxu0 %v1021
        %1206 = vmatprep.subr.mxu0 0.0
        %1207 = vmatpush1.msra.mxu0 %v1022
        %1208 = vmatprep.subr.mxu0 0.0
        %1209 = vmatpush1.msra.mxu0 %v1023
        %1210 = vmatprep.subr.mxu0 0.0
        %1211 = vmatpush1.msra.mxu0 %v1024
        %1212 = vmatprep.subr.mxu0 0.0
        %1213 = vmatpush1.msra.mxu0 %v1025
        %1214 = vmatprep.subr.mxu0 0.0
        %1215 = vmatpush1.msra.mxu0 %v1026
        %1216 = vmatprep.subr.mxu0 0.0
        %1217 = vmatpush1.msra.mxu0 %v1027
        %1218 = vmatprep.subr.mxu0 0.0
        %1219 = vmatpush1.msra.mxu0 %v1028
        %1220 = vmatprep.subr.mxu0 0.0
        %1221 = vmatpush1.msra.mxu0 %v1029
        %1222 = vmatprep.subr.mxu0 0.0
        %1223 = vmatpush1.msra.mxu0 %v1030
        %1224 = vmatprep.subr.mxu0 0.0
        %1225 = vmatpush1.msra.mxu0 %v1031
        %1226 = vmatprep.subr.mxu0 0.0
        %1227 = vmatpush1.msra.mxu0 %v1032
        %1228 = vmatprep.subr.mxu0 0.0
        %1229 = vmatpush1.msra.mxu0 %v1033
        %1230 = vmatprep.subr.mxu0 0.0
        %1231 = vmatpush1.msra.mxu0 %v1034
        %1232 = vmatprep.subr.mxu0 0.0
        %1233 = vmatpush1.msra.mxu0 %v1035
        %1234 = vmatprep.mubr.f32.mxu0 %v967
        %1235 = vmatmul.mubr.f32.gmra.mrb[0].mxu0 %v966
        %v1236 = vpop.f32.mrb[0].mxu0
        %v1237 = vadd.f32 %v1167, %v1236
        %v1238 = vpop.f32.mrb[0].mxu0
        %1239 = vdwg.mxu0
        %1240 = vmatprep.subr.mxu0 0.0
        %1241 = vmatpush1.msra.mxu0 %v1036
        %1242 = vmatprep.subr.mxu0 0.0
        %1243 = vmatpush1.msra.mxu0 %v1037
        %1244 = vmatprep.subr.mxu0 0.0
        %1245 = vmatpush1.msra.mxu0 %v1038
        %1246 = vmatprep.subr.mxu0 0.0
        %1247 = vmatpush1.msra.mxu0 %v1039
        %1248 = vmatprep.subr.mxu0 0.0
        %1249 = vmatpush1.msra.mxu0 %v1040
        %1250 = vmatprep.subr.mxu0 0.0
        %1251 = vmatpush1.msra.mxu0 %v1041
        %1252 = vmatprep.subr.mxu0 0.0
        %1253 = vmatpush1.msra.mxu0 %v1042
        %1254 = vmatprep.subr.mxu0 0.0
        %1255 = vmatpush1.msra.mxu0 %v1043
        %1256 = vmatprep.subr.mxu0 0.0
        %1257 = vmatpush1.msra.mxu0 %v1044
        %1258 = vmatprep.subr.mxu0 0.0
        %1259 = vmatpush1.msra.mxu0 %v1045
        %1260 = vmatprep.subr.mxu0 0.0
        %1261 = vmatpush1.msra.mxu0 %v1046
        %1262 = vmatprep.subr.mxu0 0.0
        %1263 = vmatpush1.msra.mxu0 %v1047
        %1264 = vmatprep.subr.mxu0 0.0
        %1265 = vmatpush1.msra.mxu0 %v1048
        %1266 = vmatprep.subr.mxu0 0.0
        %1267 = vmatpush1.msra.mxu0 %v1049
        %1268 = vmatprep.subr.mxu0 0.0
        %1269 = vmatpush1.msra.mxu0 %v1050
        %1270 = vmatprep.subr.mxu0 0.0
        %1271 = vmatpush1.msra.mxu0 %v1051
        %1272 = vmatprep.subr.mxu0 0.0
        %1273 = vmatpush1.msra.mxu0 %v1052
        %1274 = vmatprep.subr.mxu0 0.0
        %1275 = vmatpush1.msra.mxu0 %v1053
        %1276 = vmatprep.subr.mxu0 0.0
        %1277 = vmatpush1.msra.mxu0 %v1054
        %1278 = vmatprep.subr.mxu0 0.0
        %1279 = vmatpush1.msra.mxu0 %v1055
        %1280 = vmatprep.subr.mxu0 0.0
        %1281 = vmatpush1.msra.mxu0 %v1056
        %1282 = vmatprep.subr.mxu0 0.0
        %1283 = vmatpush1.msra.mxu0 %v1057
        %1284 = vmatprep.subr.mxu0 0.0
        %1285 = vmatpush1.msra.mxu0 %v1058
        %1286 = vmatprep.subr.mxu0 0.0
        %1287 = vmatpush1.msra.mxu0 %v1059
        %1288 = vmatprep.subr.mxu0 0.0
        %1289 = vmatpush1.msra.mxu0 %v1060
        %1290 = vmatprep.subr.mxu0 0.0
        %1291 = vmatpush1.msra.mxu0 %v1061
        %1292 = vmatprep.subr.mxu0 0.0
        %1293 = vmatpush1.msra.mxu0 %v1062
        %1294 = vmatprep.subr.mxu0 0.0
        %1295 = vmatpush1.msra.mxu0 %v1063
        %1296 = vmatprep.subr.mxu0 0.0
        %1297 = vmatpush1.msra.mxu0 %v1064
        %1298 = vmatprep.subr.mxu0 0.0
        %1299 = vmatpush1.msra.mxu0 %v1065
        %1300 = vmatprep.subr.mxu0 0.0
        %1301 = vmatpush1.msra.mxu0 %v1066
        %1302 = vmatprep.subr.mxu0 0.0
        %1303 = vmatpush1.msra.mxu0 %v1067
        %1304 = vmatprep.mubr.f32.mxu0 %v969
        %1305 = vmatmul.mubr.f32.gmra.mrb[0].mxu0 %v968
        %v1306 = vpop.f32.mrb[0].mxu0
        %v1307 = vadd.f32 %v1237, %v1306
        %v1308 = vpop.f32.mrb[0].mxu0
        %1309 = vdwg.mxu0
        %1310 = vmatprep.subr.mxu0 0.0
        %1311 = vmatpush1.msra.mxu0 %v1068
        %1312 = vmatprep.subr.mxu0 0.0
        %1313 = vmatpush1.msra.mxu0 %v1069
        %1314 = vmatprep.subr.mxu0 0.0
        %1315 = vmatpush1.msra.mxu0 %v1070
        %1316 = vmatprep.subr.mxu0 0.0
        %1317 = vmatpush1.msra.mxu0 %v1071
        %1318 = vmatprep.subr.mxu0 0.0
        %1319 = vmatpush1.msra.mxu0 %v1072
        %1320 = vmatprep.subr.mxu0 0.0
        %1321 = vmatpush1.msra.mxu0 %v1073
        %1322 = vmatprep.subr.mxu0 0.0
        %1323 = vmatpush1.msra.mxu0 %v1074
        %1324 = vmatprep.subr.mxu0 0.0
        %1325 = vmatpush1.msra.mxu0 %v1075
        %1326 = vmatprep.subr.mxu0 0.0
        %1327 = vmatpush1.msra.mxu0 %v1076
        %1328 = vmatprep.subr.mxu0 0.0
        %1329 = vmatpush1.msra.mxu0 %v1077
        %1330 = vmatprep.subr.mxu0 0.0
        %1331 = vmatpush1.msra.mxu0 %v1078
        %1332 = vmatprep.subr.mxu0 0.0
        %1333 = vmatpush1.msra.mxu0 %v1079
        %1334 = vmatprep.subr.mxu0 0.0
        %1335 = vmatpush1.msra.mxu0 %v1080
        %1336 = vmatprep.subr.mxu0 0.0
        %1337 = vmatpush1.msra.mxu0 %v1081
        %1338 = vmatprep.subr.mxu0 0.0
        %1339 = vmatpush1.msra.mxu0 %v1082
        %1340 = vmatprep.subr.mxu0 0.0
        %1341 = vmatpush1.msra.mxu0 %v1083
        %1342 = vmatprep.subr.mxu0 0.0
        %1343 = vmatpush1.msra.mxu0 %v1084
        %1344 = vmatprep.subr.mxu0 0.0
        %1345 = vmatpush1.msra.mxu0 %v1085
        %1346 = vmatprep.subr.mxu0 0.0
        %1347 = vmatpush1.msra.mxu0 %v1086
        %1348 = vmatprep.subr.mxu0 0.0
        %1349 = vmatpush1.msra.mxu0 %v1087
        %1350 = vmatprep.subr.mxu0 0.0
        %1351 = vmatpush1.msra.mxu0 %v1088
        %1352 = vmatprep.subr.mxu0 0.0
        %1353 = vmatpush1.msra.mxu0 %v1089
        %1354 = vmatprep.subr.mxu0 0.0
        %1355 = vmatpush1.msra.mxu0 %v1090
        %1356 = vmatprep.subr.mxu0 0.0
        %1357 = vmatpush1.msra.mxu0 %v1091
        %1358 = vmatprep.subr.mxu0 0.0
        %1359 = vmatpush1.msra.mxu0 %v1092
        %1360 = vmatprep.subr.mxu0 0.0
        %1361 = vmatpush1.msra.mxu0 %v1093
        %1362 = vmatprep.subr.mxu0 0.0
        %1363 = vmatpush1.msra.mxu0 %v1094
        %1364 = vmatprep.subr.mxu0 0.0
        %1365 = vmatpush1.msra.mxu0 %v1095
        %1366 = vmatprep.subr.mxu0 0.0
        %1367 = vmatpush1.msra.mxu0 %v1096
        %1368 = vmatprep.subr.mxu0 0.0
        %1369 = vmatpush1.msra.mxu0 %v1097
        %1370 = vmatprep.subr.mxu0 0.0
        %1371 = vmatpush1.msra.mxu0 %v1098
        %1372 = vmatprep.subr.mxu0 0.0
        %1373 = vmatpush1.msra.mxu0 %v1099
        %1374 = vmatprep.mubr.f32.mxu0 %v971
        %1375 = vmatmul.mubr.f32.gmra.mrb[0].mxu0 %v970
        %v1376 = vpop.f32.mrb[0].mxu0
        %v1377 = vadd.f32 %v1307, %v1376
        %v1378 = vpop.f32.mrb[0].mxu0
        %1379 = vdwg.mxu0
        %v1380 = vmul.f32 %v321, %v463
        %v1381 = vmul.f32 %v322, %v465
        %v1382 = vmul.f32 %v323, %v534
        %v1383 = vmul.f32 %v324, %v536
        %v1384 = vmul.f32 %v325, %v605
        %v1385 = vmul.f32 %v326, %v607
        %v1386 = vmul.f32 %v327, %v676
        %v1387 = vmul.f32 %v328, %v678
        %v1388 = vld [vmem:[%s5] sm:$0xff]
        %v1389 = vld [vmem:[%s5 + $0x8] sm:$0xff]
        %v1390 = vld [vmem:[%s5 + $0x10] sm:$0xff]
        %v1391 = vld [vmem:[%s5 + $0x18] sm:$0xff]
        %v1392 = vld [vmem:[%s5 + $0x20] sm:$0xff]
        %v1393 = vld [vmem:[%s5 + $0x28] sm:$0xff]
        %v1394 = vld [vmem:[%s5 + $0x30] sm:$0xff]
        %v1395 = vld [vmem:[%s5 + $0x38] sm:$0xff]
        %v1396 = vld [vmem:[%s5 + $0x40] sm:$0xff]
        %v1397 = vld [vmem:[%s5 + $0x48] sm:$0xff]
        %v1398 = vld [vmem:[%s5 + $0x50] sm:$0xff]
        %v1399 = vld [vmem:[%s5 + $0x58] sm:$0xff]
        %v1400 = vld [vmem:[%s5 + $0x60] sm:$0xff]
        %v1401 = vld [vmem:[%s5 + $0x68] sm:$0xff]
        %v1402 = vld [vmem:[%s5 + $0x70] sm:$0xff]
        %v1403 = vld [vmem:[%s5 + $0x78] sm:$0xff]
        %v1404 = vld [vmem:[%s5 + $0x80] sm:$0xff]
        %v1405 = vld [vmem:[%s5 + $0x88] sm:$0xff]
        %v1406 = vld [vmem:[%s5 + $0x90] sm:$0xff]
        %v1407 = vld [vmem:[%s5 + $0x98] sm:$0xff]
        %v1408 = vld [vmem:[%s5 + $0xa0] sm:$0xff]
        %v1409 = vld [vmem:[%s5 + $0xa8] sm:$0xff]
        %v1410 = vld [vmem:[%s5 + $0xb0] sm:$0xff]
        %v1411 = vld [vmem:[%s5 + $0xb8] sm:$0xff]
        %v1412 = vld [vmem:[%s5 + $0xc0] sm:$0xff]
        %v1413 = vld [vmem:[%s5 + $0xc8] sm:$0xff]
        %v1414 = vld [vmem:[%s5 + $0xd0] sm:$0xff]
        %v1415 = vld [vmem:[%s5 + $0xd8] sm:$0xff]
        %v1416 = vld [vmem:[%s5 + $0xe0] sm:$0xff]
        %v1417 = vld [vmem:[%s5 + $0xe8] sm:$0xff]
        %v1418 = vld [vmem:[%s5 + $0xf0] sm:$0xff]
        %v1419 = vld [vmem:[%s5 + $0xf8] sm:$0xff]
        %v1420 = vld [vmem:[%s5 + $0x100] sm:$0xff]
        %v1421 = vld [vmem:[%s5 + $0x108] sm:$0xff]
        %v1422 = vld [vmem:[%s5 + $0x110] sm:$0xff]
        %v1423 = vld [vmem:[%s5 + $0x118] sm:$0xff]
        %v1424 = vld [vmem:[%s5 + $0x120] sm:$0xff]
        %v1425 = vld [vmem:[%s5 + $0x128] sm:$0xff]
        %v1426 = vld [vmem:[%s5 + $0x130] sm:$0xff]
        %v1427 = vld [vmem:[%s5 + $0x138] sm:$0xff]
        %v1428 = vld [vmem:[%s5 + $0x140] sm:$0xff]
        %v1429 = vld [vmem:[%s5 + $0x148] sm:$0xff]
        %v1430 = vld [vmem:[%s5 + $0x150] sm:$0xff]
        %v1431 = vld [vmem:[%s5 + $0x158] sm:$0xff]
        %v1432 = vld [vmem:[%s5 + $0x160] sm:$0xff]
        %v1433 = vld [vmem:[%s5 + $0x168] sm:$0xff]
        %v1434 = vld [vmem:[%s5 + $0x170] sm:$0xff]
        %v1435 = vld [vmem:[%s5 + $0x178] sm:$0xff]
        %v1436 = vld [vmem:[%s5 + $0x180] sm:$0xff]
        %v1437 = vld [vmem:[%s5 + $0x188] sm:$0xff]
        %v1438 = vld [vmem:[%s5 + $0x190] sm:$0xff]
        %v1439 = vld [vmem:[%s5 + $0x198] sm:$0xff]
        %v1440 = vld [vmem:[%s5 + $0x1a0] sm:$0xff]
        %v1441 = vld [vmem:[%s5 + $0x1a8] sm:$0xff]
        %v1442 = vld [vmem:[%s5 + $0x1b0] sm:$0xff]
        %v1443 = vld [vmem:[%s5 + $0x1b8] sm:$0xff]
        %v1444 = vld [vmem:[%s5 + $0x1c0] sm:$0xff]
        %v1445 = vld [vmem:[%s5 + $0x1c8] sm:$0xff]
        %v1446 = vld [vmem:[%s5 + $0x1d0] sm:$0xff]
        %v1447 = vld [vmem:[%s5 + $0x1d8] sm:$0xff]
        %v1448 = vld [vmem:[%s5 + $0x1e0] sm:$0xff]
        %v1449 = vld [vmem:[%s5 + $0x1e8] sm:$0xff]
        %v1450 = vld [vmem:[%s5 + $0x1f0] sm:$0xff]
        %v1451 = vld [vmem:[%s5 + $0x1f8] sm:$0xff]
        %v1452 = vld [vmem:[%s5 + $0x200] sm:$0xff]
        %v1453 = vld [vmem:[%s5 + $0x208] sm:$0xff]
        %v1454 = vld [vmem:[%s5 + $0x210] sm:$0xff]
        %v1455 = vld [vmem:[%s5 + $0x218] sm:$0xff]
        %v1456 = vld [vmem:[%s5 + $0x220] sm:$0xff]
        %v1457 = vld [vmem:[%s5 + $0x228] sm:$0xff]
        %v1458 = vld [vmem:[%s5 + $0x230] sm:$0xff]
        %v1459 = vld [vmem:[%s5 + $0x238] sm:$0xff]
        %v1460 = vld [vmem:[%s5 + $0x240] sm:$0xff]
        %v1461 = vld [vmem:[%s5 + $0x248] sm:$0xff]
        %v1462 = vld [vmem:[%s5 + $0x250] sm:$0xff]
        %v1463 = vld [vmem:[%s5 + $0x258] sm:$0xff]
        %v1464 = vld [vmem:[%s5 + $0x260] sm:$0xff]
        %v1465 = vld [vmem:[%s5 + $0x268] sm:$0xff]
        %v1466 = vld [vmem:[%s5 + $0x270] sm:$0xff]
        %v1467 = vld [vmem:[%s5 + $0x278] sm:$0xff]
        %v1468 = vld [vmem:[%s5 + $0x280] sm:$0xff]
        %v1469 = vld [vmem:[%s5 + $0x288] sm:$0xff]
        %v1470 = vld [vmem:[%s5 + $0x290] sm:$0xff]
        %v1471 = vld [vmem:[%s5 + $0x298] sm:$0xff]
        %v1472 = vld [vmem:[%s5 + $0x2a0] sm:$0xff]
        %v1473 = vld [vmem:[%s5 + $0x2a8] sm:$0xff]
        %v1474 = vld [vmem:[%s5 + $0x2b0] sm:$0xff]
        %v1475 = vld [vmem:[%s5 + $0x2b8] sm:$0xff]
        %v1476 = vld [vmem:[%s5 + $0x2c0] sm:$0xff]
        %v1477 = vld [vmem:[%s5 + $0x2c8] sm:$0xff]
        %v1478 = vld [vmem:[%s5 + $0x2d0] sm:$0xff]
        %v1479 = vld [vmem:[%s5 + $0x2d8] sm:$0xff]
        %v1480 = vld [vmem:[%s5 + $0x2e0] sm:$0xff]
        %v1481 = vld [vmem:[%s5 + $0x2e8] sm:$0xff]
        %v1482 = vld [vmem:[%s5 + $0x2f0] sm:$0xff]
        %v1483 = vld [vmem:[%s5 + $0x2f8] sm:$0xff]
        %v1484 = vld [vmem:[%s5 + $0x300] sm:$0xff]
        %v1485 = vld [vmem:[%s5 + $0x308] sm:$0xff]
        %v1486 = vld [vmem:[%s5 + $0x310] sm:$0xff]
        %v1487 = vld [vmem:[%s5 + $0x318] sm:$0xff]
        %v1488 = vld [vmem:[%s5 + $0x320] sm:$0xff]
        %v1489 = vld [vmem:[%s5 + $0x328] sm:$0xff]
        %v1490 = vld [vmem:[%s5 + $0x330] sm:$0xff]
        %v1491 = vld [vmem:[%s5 + $0x338] sm:$0xff]
        %v1492 = vld [vmem:[%s5 + $0x340] sm:$0xff]
        %v1493 = vld [vmem:[%s5 + $0x348] sm:$0xff]
        %v1494 = vld [vmem:[%s5 + $0x350] sm:$0xff]
        %v1495 = vld [vmem:[%s5 + $0x358] sm:$0xff]
        %v1496 = vld [vmem:[%s5 + $0x360] sm:$0xff]
        %v1497 = vld [vmem:[%s5 + $0x368] sm:$0xff]
        %v1498 = vld [vmem:[%s5 + $0x370] sm:$0xff]
        %v1499 = vld [vmem:[%s5 + $0x378] sm:$0xff]
        %v1500 = vld [vmem:[%s5 + $0x380] sm:$0xff]
        %v1501 = vld [vmem:[%s5 + $0x388] sm:$0xff]
        %v1502 = vld [vmem:[%s5 + $0x390] sm:$0xff]
        %v1503 = vld [vmem:[%s5 + $0x398] sm:$0xff]
        %v1504 = vld [vmem:[%s5 + $0x3a0] sm:$0xff]
        %v1505 = vld [vmem:[%s5 + $0x3a8] sm:$0xff]
        %v1506 = vld [vmem:[%s5 + $0x3b0] sm:$0xff]
        %v1507 = vld [vmem:[%s5 + $0x3b8] sm:$0xff]
        %v1508 = vld [vmem:[%s5 + $0x3c0] sm:$0xff]
        %v1509 = vld [vmem:[%s5 + $0x3c8] sm:$0xff]
        %v1510 = vld [vmem:[%s5 + $0x3d0] sm:$0xff]
        %v1511 = vld [vmem:[%s5 + $0x3d8] sm:$0xff]
        %v1512 = vld [vmem:[%s5 + $0x3e0] sm:$0xff]
        %v1513 = vld [vmem:[%s5 + $0x3e8] sm:$0xff]
        %v1514 = vld [vmem:[%s5 + $0x3f0] sm:$0xff]
        %v1515 = vld [vmem:[%s5 + $0x3f8] sm:$0xff]
        %1516 = vmatprep.subr.mxu0 0.0
        %1517 = vmatpush1.msra.mxu0 %v1388
        %1518 = vmatprep.subr.mxu0 0.0
        %1519 = vmatpush1.msra.mxu0 %v1389
        %1520 = vmatprep.subr.mxu0 0.0
        %1521 = vmatpush1.msra.mxu0 %v1390
        %1522 = vmatprep.subr.mxu0 0.0
        %1523 = vmatpush1.msra.mxu0 %v1391
        %1524 = vmatprep.subr.mxu0 0.0
        %1525 = vmatpush1.msra.mxu0 %v1392
        %1526 = vmatprep.subr.mxu0 0.0
        %1527 = vmatpush1.msra.mxu0 %v1393
        %1528 = vmatprep.subr.mxu0 0.0
        %1529 = vmatpush1.msra.mxu0 %v1394
        %1530 = vmatprep.subr.mxu0 0.0
        %1531 = vmatpush1.msra.mxu0 %v1395
        %1532 = vmatprep.subr.mxu0 0.0
        %1533 = vmatpush1.msra.mxu0 %v1396
        %1534 = vmatprep.subr.mxu0 0.0
        %1535 = vmatpush1.msra.mxu0 %v1397
        %1536 = vmatprep.subr.mxu0 0.0
        %1537 = vmatpush1.msra.mxu0 %v1398
        %1538 = vmatprep.subr.mxu0 0.0
        %1539 = vmatpush1.msra.mxu0 %v1399
        %1540 = vmatprep.subr.mxu0 0.0
        %1541 = vmatpush1.msra.mxu0 %v1400
        %1542 = vmatprep.subr.mxu0 0.0
        %1543 = vmatpush1.msra.mxu0 %v1401
        %1544 = vmatprep.subr.mxu0 0.0
        %1545 = vmatpush1.msra.mxu0 %v1402
        %1546 = vmatprep.subr.mxu0 0.0
        %1547 = vmatpush1.msra.mxu0 %v1403
        %1548 = vmatprep.subr.mxu0 0.0
        %1549 = vmatpush1.msra.mxu0 %v1404
        %1550 = vmatprep.subr.mxu0 0.0
        %1551 = vmatpush1.msra.mxu0 %v1405
        %1552 = vmatprep.subr.mxu0 0.0
        %1553 = vmatpush1.msra.mxu0 %v1406
        %1554 = vmatprep.subr.mxu0 0.0
        %1555 = vmatpush1.msra.mxu0 %v1407
        %1556 = vmatprep.subr.mxu0 0.0
        %1557 = vmatpush1.msra.mxu0 %v1408
        %1558 = vmatprep.subr.mxu0 0.0
        %1559 = vmatpush1.msra.mxu0 %v1409
        %1560 = vmatprep.subr.mxu0 0.0
        %1561 = vmatpush1.msra.mxu0 %v1410
        %1562 = vmatprep.subr.mxu0 0.0
        %1563 = vmatpush1.msra.mxu0 %v1411
        %1564 = vmatprep.subr.mxu0 0.0
        %1565 = vmatpush1.msra.mxu0 %v1412
        %1566 = vmatprep.subr.mxu0 0.0
        %1567 = vmatpush1.msra.mxu0 %v1413
        %1568 = vmatprep.subr.mxu0 0.0
        %1569 = vmatpush1.msra.mxu0 %v1414
        %1570 = vmatprep.subr.mxu0 0.0
        %1571 = vmatpush1.msra.mxu0 %v1415
        %1572 = vmatprep.subr.mxu0 0.0
        %1573 = vmatpush1.msra.mxu0 %v1416
        %1574 = vmatprep.subr.mxu0 0.0
        %1575 = vmatpush1.msra.mxu0 %v1417
        %1576 = vmatprep.subr.mxu0 0.0
        %1577 = vmatpush1.msra.mxu0 %v1418
        %1578 = vmatprep.subr.mxu0 0.0
        %1579 = vmatpush1.msra.mxu0 %v1419
        %1580 = vmatprep.mubr.f32.mxu0 %v1381
        %1581 = vmatmul.mubr.f32.gmra.mrb[0].mxu0 %v1380
        %v1582 = vpop.f32.mrb[0].mxu0
        %v1583 = vadd.f32 0.0, %v1582
        %v1584 = vpop.f32.mrb[0].mxu0
        %1585 = vdwg.mxu0
        %1586 = vmatprep.subr.mxu0 0.0
        %1587 = vmatpush1.msra.mxu0 %v1420
        %1588 = vmatprep.subr.mxu0 0.0
        %1589 = vmatpush1.msra.mxu0 %v1421
        %1590 = vmatprep.subr.mxu0 0.0
        %1591 = vmatpush1.msra.mxu0 %v1422
        %1592 = vmatprep.subr.mxu0 0.0
        %1593 = vmatpush1.msra.mxu0 %v1423
        %1594 = vmatprep.subr.mxu0 0.0
        %1595 = vmatpush1.msra.mxu0 %v1424
        %1596 = vmatprep.subr.mxu0 0.0
        %1597 = vmatpush1.msra.mxu0 %v1425
        %1598 = vmatprep.subr.mxu0 0.0
        %1599 = vmatpush1.msra.mxu0 %v1426
        %1600 = vmatprep.subr.mxu0 0.0
        %1601 = vmatpush1.msra.mxu0 %v1427
        %1602 = vmatprep.subr.mxu0 0.0
        %1603 = vmatpush1.msra.mxu0 %v1428
        %1604 = vmatprep.subr.mxu0 0.0
        %1605 = vmatpush1.msra.mxu0 %v1429
        %1606 = vmatprep.subr.mxu0 0.0
        %1607 = vmatpush1.msra.mxu0 %v1430
        %1608 = vmatprep.subr.mxu0 0.0
        %1609 = vmatpush1.msra.mxu0 %v1431
        %1610 = vmatprep.subr.mxu0 0.0
        %1611 = vmatpush1.msra.mxu0 %v1432
        %1612 = vmatprep.subr.mxu0 0.0
        %1613 = vmatpush1.msra.mxu0 %v1433
        %1614 = vmatprep.subr.mxu0 0.0
        %1615 = vmatpush1.msra.mxu0 %v1434
        %1616 = vmatprep.subr.mxu0 0.0
        %1617 = vmatpush1.msra.mxu0 %v1435
        %1618 = vmatprep.subr.mxu0 0.0
        %1619 = vmatpush1.msra.mxu0 %v1436
        %1620 = vmatprep.subr.mxu0 0.0
        %1621 = vmatpush1.msra.mxu0 %v1437
        %1622 = vmatprep.subr.mxu0 0.0
        %1623 = vmatpush1.msra.mxu0 %v1438
        %1624 = vmatprep.subr.mxu0 0.0
        %1625 = vmatpush1.msra.mxu0 %v1439
        %1626 = vmatprep.subr.mxu0 0.0
        %1627 = vmatpush1.msra.mxu0 %v1440
        %1628 = vmatprep.subr.mxu0 0.0
        %1629 = vmatpush1.msra.mxu0 %v1441
        %1630 = vmatprep.subr.mxu0 0.0
        %1631 = vmatpush1.msra.mxu0 %v1442
        %1632 = vmatprep.subr.mxu0 0.0
        %1633 = vmatpush1.msra.mxu0 %v1443
        %1634 = vmatprep.subr.mxu0 0.0
        %1635 = vmatpush1.msra.mxu0 %v1444
        %1636 = vmatprep.subr.mxu0 0.0
        %1637 = vmatpush1.msra.mxu0 %v1445
        %1638 = vmatprep.subr.mxu0 0.0
        %1639 = vmatpush1.msra.mxu0 %v1446
        %1640 = vmatprep.subr.mxu0 0.0
        %1641 = vmatpush1.msra.mxu0 %v1447
        %1642 = vmatprep.subr.mxu0 0.0
        %1643 = vmatpush1.msra.mxu0 %v1448
        %1644 = vmatprep.subr.mxu0 0.0
        %1645 = vmatpush1.msra.mxu0 %v1449
        %1646 = vmatprep.subr.mxu0 0.0
        %1647 = vmatpush1.msra.mxu0 %v1450
        %1648 = vmatprep.subr.mxu0 0.0
        %1649 = vmatpush1.msra.mxu0 %v1451
        %1650 = vmatprep.mubr.f32.mxu0 %v1383
        %1651 = vmatmul.mubr.f32.gmra.mrb[0].mxu0 %v1382
        %v1652 = vpop.f32.mrb[0].mxu0
        %v1653 = vadd.f32 %v1583, %v1652
        %v1654 = vpop.f32.mrb[0].mxu0
        %1655 = vdwg.mxu0
        %1656 = vmatprep.subr.mxu0 0.0
        %1657 = vmatpush1.msra.mxu0 %v1452
        %1658 = vmatprep.subr.mxu0 0.0
        %1659 = vmatpush1.msra.mxu0 %v1453
        %1660 = vmatprep.subr.mxu0 0.0
        %1661 = vmatpush1.msra.mxu0 %v1454
        %1662 = vmatprep.subr.mxu0 0.0
        %1663 = vmatpush1.msra.mxu0 %v1455
        %1664 = vmatprep.subr.mxu0 0.0
        %1665 = vmatpush1.msra.mxu0 %v1456
        %1666 = vmatprep.subr.mxu0 0.0
        %1667 = vmatpush1.msra.mxu0 %v1457
        %1668 = vmatprep.subr.mxu0 0.0
        %1669 = vmatpush1.msra.mxu0 %v1458
        %1670 = vmatprep.subr.mxu0 0.0
        %1671 = vmatpush1.msra.mxu0 %v1459
        %1672 = vmatprep.subr.mxu0 0.0
        %1673 = vmatpush1.msra.mxu0 %v1460
        %1674 = vmatprep.subr.mxu0 0.0
        %1675 = vmatpush1.msra.mxu0 %v1461
        %1676 = vmatprep.subr.mxu0 0.0
        %1677 = vmatpush1.msra.mxu0 %v1462
        %1678 = vmatprep.subr.mxu0 0.0
        %1679 = vmatpush1.msra.mxu0 %v1463
        %1680 = vmatprep.subr.mxu0 0.0
        %1681 = vmatpush1.msra.mxu0 %v1464
        %1682 = vmatprep.subr.mxu0 0.0
        %1683 = vmatpush1.msra.mxu0 %v1465
        %1684 = vmatprep.subr.mxu0 0.0
        %1685 = vmatpush1.msra.mxu0 %v1466
        %1686 = vmatprep.subr.mxu0 0.0
        %1687 = vmatpush1.msra.mxu0 %v1467
        %1688 = vmatprep.subr.mxu0 0.0
        %1689 = vmatpush1.msra.mxu0 %v1468
        %1690 = vmatprep.subr.mxu0 0.0
        %1691 = vmatpush1.msra.mxu0 %v1469
        %1692 = vmatprep.subr.mxu0 0.0
        %1693 = vmatpush1.msra.mxu0 %v1470
        %1694 = vmatprep.subr.mxu0 0.0
        %1695 = vmatpush1.msra.mxu0 %v1471
        %1696 = vmatprep.subr.mxu0 0.0
        %1697 = vmatpush1.msra.mxu0 %v1472
        %1698 = vmatprep.subr.mxu0 0.0
        %1699 = vmatpush1.msra.mxu0 %v1473
        %1700 = vmatprep.subr.mxu0 0.0
        %1701 = vmatpush1.msra.mxu0 %v1474
        %1702 = vmatprep.subr.mxu0 0.0
        %1703 = vmatpush1.msra.mxu0 %v1475
        %1704 = vmatprep.subr.mxu0 0.0
        %1705 = vmatpush1.msra.mxu0 %v1476
        %1706 = vmatprep.subr.mxu0 0.0
        %1707 = vmatpush1.msra.mxu0 %v1477
        %1708 = vmatprep.subr.mxu0 0.0
        %1709 = vmatpush1.msra.mxu0 %v1478
        %1710 = vmatprep.subr.mxu0 0.0
        %1711 = vmatpush1.msra.mxu0 %v1479
        %1712 = vmatprep.subr.mxu0 0.0
        %1713 = vmatpush1.msra.mxu0 %v1480
        %1714 = vmatprep.subr.mxu0 0.0
        %1715 = vmatpush1.msra.mxu0 %v1481
        %1716 = vmatprep.subr.mxu0 0.0
        %1717 = vmatpush1.msra.mxu0 %v1482
        %1718 = vmatprep.subr.mxu0 0.0
        %1719 = vmatpush1.msra.mxu0 %v1483
        %1720 = vmatprep.mubr.f32.mxu0 %v1385
        %1721 = vmatmul.mubr.f32.gmra.mrb[0].mxu0 %v1384
        %v1722 = vpop.f32.mrb[0].mxu0
        %v1723 = vadd.f32 %v1653, %v1722
        %v1724 = vpop.f32.mrb[0].mxu0
        %1725 = vdwg.mxu0
        %1726 = vmatprep.subr.mxu0 0.0
        %1727 = vmatpush1.msra.mxu0 %v1484
        %1728 = vmatprep.subr.mxu0 0.0
        %1729 = vmatpush1.msra.mxu0 %v1485
        %1730 = vmatprep.subr.mxu0 0.0
        %1731 = vmatpush1.msra.mxu0 %v1486
        %1732 = vmatprep.subr.mxu0 0.0
        %1733 = vmatpush1.msra.mxu0 %v1487
        %1734 = vmatprep.subr.mxu0 0.0
        %1735 = vmatpush1.msra.mxu0 %v1488
        %1736 = vmatprep.subr.mxu0 0.0
        %1737 = vmatpush1.msra.mxu0 %v1489
        %1738 = vmatprep.subr.mxu0 0.0
        %1739 = vmatpush1.msra.mxu0 %v1490
        %1740 = vmatprep.subr.mxu0 0.0
        %1741 = vmatpush1.msra.mxu0 %v1491
        %1742 = vmatprep.subr.mxu0 0.0
        %1743 = vmatpush1.msra.mxu0 %v1492
        %1744 = vmatprep.subr.mxu0 0.0
        %1745 = vmatpush1.msra.mxu0 %v1493
        %1746 = vmatprep.subr.mxu0 0.0
        %1747 = vmatpush1.msra.mxu0 %v1494
        %1748 = vmatprep.subr.mxu0 0.0
        %1749 = vmatpush1.msra.mxu0 %v1495
        %1750 = vmatprep.subr.mxu0 0.0
        %1751 = vmatpush1.msra.mxu0 %v1496
        %1752 = vmatprep.subr.mxu0 0.0
        %1753 = vmatpush1.msra.mxu0 %v1497
        %1754 = vmatprep.subr.mxu0 0.0
        %1755 = vmatpush1.msra.mxu0 %v1498
        %1756 = vmatprep.subr.mxu0 0.0
        %1757 = vmatpush1.msra.mxu0 %v1499
        %1758 = vmatprep.subr.mxu0 0.0
        %1759 = vmatpush1.msra.mxu0 %v1500
        %1760 = vmatprep.subr.mxu0 0.0
        %1761 = vmatpush1.msra.mxu0 %v1501
        %1762 = vmatprep.subr.mxu0 0.0
        %1763 = vmatpush1.msra.mxu0 %v1502
        %1764 = vmatprep.subr.mxu0 0.0
        %1765 = vmatpush1.msra.mxu0 %v1503
        %1766 = vmatprep.subr.mxu0 0.0
        %1767 = vmatpush1.msra.mxu0 %v1504
        %1768 = vmatprep.subr.mxu0 0.0
        %1769 = vmatpush1.msra.mxu0 %v1505
        %1770 = vmatprep.subr.mxu0 0.0
        %1771 = vmatpush1.msra.mxu0 %v1506
        %1772 = vmatprep.subr.mxu0 0.0
        %1773 = vmatpush1.msra.mxu0 %v1507
        %1774 = vmatprep.subr.mxu0 0.0
        %1775 = vmatpush1.msra.mxu0 %v1508
        %1776 = vmatprep.subr.mxu0 0.0
        %1777 = vmatpush1.msra.mxu0 %v1509
        %1778 = vmatprep.subr.mxu0 0.0
        %1779 = vmatpush1.msra.mxu0 %v1510
        %1780 = vmatprep.subr.mxu0 0.0
        %1781 = vmatpush1.msra.mxu0 %v1511
        %1782 = vmatprep.subr.mxu0 0.0
        %1783 = vmatpush1.msra.mxu0 %v1512
        %1784 = vmatprep.subr.mxu0 0.0
        %1785 = vmatpush1.msra.mxu0 %v1513
        %1786 = vmatprep.subr.mxu0 0.0
        %1787 = vmatpush1.msra.mxu0 %v1514
        %1788 = vmatprep.subr.mxu0 0.0
        %1789 = vmatpush1.msra.mxu0 %v1515
        %1790 = vmatprep.mubr.f32.mxu0 %v1387
        %1791 = vmatmul.mubr.f32.gmra.mrb[0].mxu0 %v1386
        %v1792 = vpop.f32.mrb[0].mxu0
        %v1793 = vadd.f32 %v1723, %v1792
        %v1794 = vpop.f32.mrb[0].mxu0
        %1795 = vdwg.mxu0
        %v1796 = vmul.f32 %v1377, %v319
        %v1797 = vsel %vm308, %v1796, 0.0
        %1798 = vadd.xlane.f32.xlu0 %v1797
        %v1799 = vpop.xlane.xlu0 %1798
        %v1800 = vsub.f32 %v1377, %v1799
        %v1802 = vsel %vm308, %v1793, 0
        %1804 = vmatprep.subr.mxu0 %v362
        %1805 = vmatpush1.msra.mxu0 %v361
        %1806 = vmatprep.subr.mxu0 %v370
        %1807 = vmatpush1.msra.mxu0 %v369
        %1808 = vmatprep.subr.mxu0 %v378
        %1809 = vmatpush1.msra.mxu0 %v377
        %1810 = vmatprep.subr.mxu0 %v386
        %1811 = vmatpush1.msra.mxu0 %v385
        %1812 = vmatprep.subr.mxu0 0.0
        %1813 = vmatpush1.msra.mxu0 0.0
        %1814 = vmatprep.subr.mxu0 0.0
        %1815 = vmatpush1.msra.mxu0 0.0
        %1816 = vmatprep.subr.mxu0 0.0
        %1817 = vmatpush1.msra.mxu0 0.0
        %1818 = vmatprep.subr.mxu0 0.0
        %1819 = vmatpush1.msra.mxu0 0.0
        %1820 = vmatprep.subr.mxu0 0.0
        %1821 = vmatpush1.msra.mxu0 0.0
        %1822 = vmatprep.subr.mxu0 0.0
        %1823 = vmatpush1.msra.mxu0 0.0
        %1824 = vmatprep.subr.mxu0 0.0
        %1825 = vmatpush1.msra.mxu0 0.0
        %1826 = vmatprep.subr.mxu0 0.0
        %1827 = vmatpush1.msra.mxu0 0.0
        %1828 = vmatprep.subr.mxu0 0.0
        %1829 = vmatpush1.msra.mxu0 0.0
        %1830 = vmatprep.subr.mxu0 0.0
        %1831 = vmatpush1.msra.mxu0 0.0
        %1832 = vmatprep.subr.mxu0 0.0
        %1833 = vmatpush1.msra.mxu0 0.0
        %1834 = vmatprep.subr.mxu0 0.0
        %1835 = vmatpush1.msra.mxu0 0.0
        %1836 = vmatprep.subr.mxu0 0.0
        %1837 = vmatpush1.msra.mxu0 0.0
        %1838 = vmatprep.subr.mxu0 0.0
        %1839 = vmatpush1.msra.mxu0 0.0
        %1840 = vmatprep.subr.mxu0 0.0
        %1841 = vmatpush1.msra.mxu0 0.0
        %1842 = vmatprep.subr.mxu0 0.0
        %1843 = vmatpush1.msra.mxu0 0.0
        %1844 = vmatprep.subr.mxu0 0.0
        %1845 = vmatpush1.msra.mxu0 0.0
        %1846 = vmatprep.subr.mxu0 0.0
        %1847 = vmatpush1.msra.mxu0 0.0
        %1848 = vmatprep.subr.mxu0 0.0
        %1849 = vmatpush1.msra.mxu0 0.0
        %1850 = vmatprep.subr.mxu0 0.0
        %1851 = vmatpush1.msra.mxu0 0.0
        %1852 = vmatprep.subr.mxu0 0.0
        %1853 = vmatpush1.msra.mxu0 0.0
        %1854 = vmatprep.subr.mxu0 0.0
        %1855 = vmatpush1.msra.mxu0 0.0
        %1856 = vmatprep.subr.mxu0 0.0
        %1857 = vmatpush1.msra.mxu0 0.0
        %1858 = vmatprep.subr.mxu0 0.0
        %1859 = vmatpush1.msra.mxu0 0.0
        %1860 = vmatprep.subr.mxu0 0.0
        %1861 = vmatpush1.msra.mxu0 0.0
        %1862 = vmatprep.subr.mxu0 0.0
        %1863 = vmatpush1.msra.mxu0 0.0
        %1864 = vmatprep.subr.mxu0 0.0
        %1865 = vmatpush1.msra.mxu0 0.0
        %1866 = vmatprep.subr.mxu0 0.0
        %1867 = vmatpush1.msra.mxu0 0.0
        %1868 = vmatprep.mubr.f32.mxu0 0.0
        %1869 = vmatmul.mubr.f32.gmra.mrb[0].mxu0 %v1802
        %v1870 = vpop.f32.mrb[0].mxu0
        %v1871 = vadd.f32 0.0, %v1870
        %v1872 = vpop.f32.mrb[0].mxu0
        %v1873 = vadd.f32 0.0, %v1872
        %1874 = vdwg.mxu0
        %1875 = vmatprep.subr.mxu0 %v364
        %1876 = vmatpush1.msra.mxu0 %v363
        %1877 = vmatprep.subr.mxu0 %v372
        %1878 = vmatpush1.msra.mxu0 %v371
        %1879 = vmatprep.subr.mxu0 %v380
        %1880 = vmatpush1.msra.mxu0 %v379
        %1881 = vmatprep.subr.mxu0 %v388
        %1882 = vmatpush1.msra.mxu0 %v387
        %1883 = vmatprep.subr.mxu0 0.0
        %1884 = vmatpush1.msra.mxu0 0.0
        %1885 = vmatprep.subr.mxu0 0.0
        %1886 = vmatpush1.msra.mxu0 0.0
        %1887 = vmatprep.subr.mxu0 0.0
        %1888 = vmatpush1.msra.mxu0 0.0
        %1889 = vmatprep.subr.mxu0 0.0
        %1890 = vmatpush1.msra.mxu0 0.0
        %1891 = vmatprep.subr.mxu0 0.0
        %1892 = vmatpush1.msra.mxu0 0.0
        %1893 = vmatprep.subr.mxu0 0.0
        %1894 = vmatpush1.msra.mxu0 0.0
        %1895 = vmatprep.subr.mxu0 0.0
        %1896 = vmatpush1.msra.mxu0 0.0
        %1897 = vmatprep.subr.mxu0 0.0
        %1898 = vmatpush1.msra.mxu0 0.0
        %1899 = vmatprep.subr.mxu0 0.0
        %1900 = vmatpush1.msra.mxu0 0.0
        %1901 = vmatprep.subr.mxu0 0.0
        %1902 = vmatpush1.msra.mxu0 0.0
        %1903 = vmatprep.subr.mxu0 0.0
        %1904 = vmatpush1.msra.mxu0 0.0
        %1905 = vmatprep.subr.mxu0 0.0
        %1906 = vmatpush1.msra.mxu0 0.0
        %1907 = vmatprep.subr.mxu0 0.0
        %1908 = vmatpush1.msra.mxu0 0.0
        %1909 = vmatprep.subr.mxu0 0.0
        %1910 = vmatpush1.msra.mxu0 0.0
        %1911 = vmatprep.subr.mxu0 0.0
        %1912 = vmatpush1.msra.mxu0 0.0
        %1913 = vmatprep.subr.mxu0 0.0
        %1914 = vmatpush1.msra.mxu0 0.0
        %1915 = vmatprep.subr.mxu0 0.0
        %1916 = vmatpush1.msra.mxu0 0.0
        %1917 = vmatprep.subr.mxu0 0.0
        %1918 = vmatpush1.msra.mxu0 0.0
        %1919 = vmatprep.subr.mxu0 0.0
        %1920 = vmatpush1.msra.mxu0 0.0
        %1921 = vmatprep.subr.mxu0 0.0
        %1922 = vmatpush1.msra.mxu0 0.0
        %1923 = vmatprep.subr.mxu0 0.0
        %1924 = vmatpush1.msra.mxu0 0.0
        %1925 = vmatprep.subr.mxu0 0.0
        %1926 = vmatpush1.msra.mxu0 0.0
        %1927 = vmatprep.subr.mxu0 0.0
        %1928 = vmatpush1.msra.mxu0 0.0
        %1929 = vmatprep.subr.mxu0 0.0
        %1930 = vmatpush1.msra.mxu0 0.0
        %1931 = vmatprep.subr.mxu0 0.0
        %1932 = vmatpush1.msra.mxu0 0.0
        %1933 = vmatprep.subr.mxu0 0.0
        %1934 = vmatpush1.msra.mxu0 0.0
        %1935 = vmatprep.subr.mxu0 0.0
        %1936 = vmatpush1.msra.mxu0 0.0
        %1937 = vmatprep.subr.mxu0 0.0
        %1938 = vmatpush1.msra.mxu0 0.0
        %1939 = vmatprep.mubr.f32.mxu0 0.0
        %1940 = vmatmul.mubr.f32.gmra.mrb[0].mxu0 %v1802
        %v1941 = vpop.f32.mrb[0].mxu0
        %v1942 = vadd.f32 0.0, %v1941
        %v1943 = vpop.f32.mrb[0].mxu0
        %v1944 = vadd.f32 0.0, %v1943
        %1945 = vdwg.mxu0
        %1946 = vmatprep.subr.mxu0 %v366
        %1947 = vmatpush1.msra.mxu0 %v365
        %1948 = vmatprep.subr.mxu0 %v374
        %1949 = vmatpush1.msra.mxu0 %v373
        %1950 = vmatprep.subr.mxu0 %v382
        %1951 = vmatpush1.msra.mxu0 %v381
        %1952 = vmatprep.subr.mxu0 %v390
        %1953 = vmatpush1.msra.mxu0 %v389
        %1954 = vmatprep.subr.mxu0 0.0
        %1955 = vmatpush1.msra.mxu0 0.0
        %1956 = vmatprep.subr.mxu0 0.0
        %1957 = vmatpush1.msra.mxu0 0.0
        %1958 = vmatprep.subr.mxu0 0.0
        %1959 = vmatpush1.msra.mxu0 0.0
        %1960 = vmatprep.subr.mxu0 0.0
        %1961 = vmatpush1.msra.mxu0 0.0
        %1962 = vmatprep.subr.mxu0 0.0
        %1963 = vmatpush1.msra.mxu0 0.0
        %1964 = vmatprep.subr.mxu0 0.0
        %1965 = vmatpush1.msra.mxu0 0.0
        %1966 = vmatprep.subr.mxu0 0.0
        %1967 = vmatpush1.msra.mxu0 0.0
        %1968 = vmatprep.subr.mxu0 0.0
        %1969 = vmatpush1.msra.mxu0 0.0
        %1970 = vmatprep.subr.mxu0 0.0
        %1971 = vmatpush1.msra.mxu0 0.0
        %1972 = vmatprep.subr.mxu0 0.0
        %1973 = vmatpush1.msra.mxu0 0.0
        %1974 = vmatprep.subr.mxu0 0.0
        %1975 = vmatpush1.msra.mxu0 0.0
        %1976 = vmatprep.subr.mxu0 0.0
        %1977 = vmatpush1.msra.mxu0 0.0
        %1978 = vmatprep.subr.mxu0 0.0
        %1979 = vmatpush1.msra.mxu0 0.0
        %1980 = vmatprep.subr.mxu0 0.0
        %1981 = vmatpush1.msra.mxu0 0.0
        %1982 = vmatprep.subr.mxu0 0.0
        %1983 = vmatpush1.msra.mxu0 0.0
        %1984 = vmatprep.subr.mxu0 0.0
        %1985 = vmatpush1.msra.mxu0 0.0
        %1986 = vmatprep.subr.mxu0 0.0
        %1987 = vmatpush1.msra.mxu0 0.0
        %1988 = vmatprep.subr.mxu0 0.0
        %1989 = vmatpush1.msra.mxu0 0.0
        %1990 = vmatprep.subr.mxu0 0.0
        %1991 = vmatpush1.msra.mxu0 0.0
        %1992 = vmatprep.subr.mxu0 0.0
        %1993 = vmatpush1.msra.mxu0 0.0
        %1994 = vmatprep.subr.mxu0 0.0
        %1995 = vmatpush1.msra.mxu0 0.0
        %1996 = vmatprep.subr.mxu0 0.0
        %1997 = vmatpush1.msra.mxu0 0.0
        %1998 = vmatprep.subr.mxu0 0.0
        %1999 = vmatpush1.msra.mxu0 0.0
        %2000 = vmatprep.subr.mxu0 0.0
        %2001 = vmatpush1.msra.mxu0 0.0
        %2002 = vmatprep.subr.mxu0 0.0
        %2003 = vmatpush1.msra.mxu0 0.0
        %2004 = vmatprep.subr.mxu0 0.0
        %2005 = vmatpush1.msra.mxu0 0.0
        %2006 = vmatprep.subr.mxu0 0.0
        %2007 = vmatpush1.msra.mxu0 0.0
        %2008 = vmatprep.subr.mxu0 0.0
        %2009 = vmatpush1.msra.mxu0 0.0
        %2010 = vmatprep.mubr.f32.mxu0 0.0
        %2011 = vmatmul.mubr.f32.gmra.mrb[0].mxu0 %v1802
        %v2012 = vpop.f32.mrb[0].mxu0
        %v2013 = vadd.f32 0.0, %v2012
        %v2014 = vpop.f32.mrb[0].mxu0
        %v2015 = vadd.f32 0.0, %v2014
        %2016 = vdwg.mxu0
        %2017 = vmatprep.subr.mxu0 %v368
        %2018 = vmatpush1.msra.mxu0 %v367
        %2019 = vmatprep.subr.mxu0 %v376
        %2020 = vmatpush1.msra.mxu0 %v375
        %2021 = vmatprep.subr.mxu0 %v384
        %2022 = vmatpush1.msra.mxu0 %v383
        %2023 = vmatprep.subr.mxu0 %v392
        %2024 = vmatpush1.msra.mxu0 %v391
        %2025 = vmatprep.subr.mxu0 0.0
        %2026 = vmatpush1.msra.mxu0 0.0
        %2027 = vmatprep.subr.mxu0 0.0
        %2028 = vmatpush1.msra.mxu0 0.0
        %2029 = vmatprep.subr.mxu0 0.0
        %2030 = vmatpush1.msra.mxu0 0.0
        %2031 = vmatprep.subr.mxu0 0.0
        %2032 = vmatpush1.msra.mxu0 0.0
        %2033 = vmatprep.subr.mxu0 0.0
        %2034 = vmatpush1.msra.mxu0 0.0
        %2035 = vmatprep.subr.mxu0 0.0
        %2036 = vmatpush1.msra.mxu0 0.0
        %2037 = vmatprep.subr.mxu0 0.0
        %2038 = vmatpush1.msra.mxu0 0.0
        %2039 = vmatprep.subr.mxu0 0.0
        %2040 = vmatpush1.msra.mxu0 0.0
        %2041 = vmatprep.subr.mxu0 0.0
        %2042 = vmatpush1.msra.mxu0 0.0
        %2043 = vmatprep.subr.mxu0 0.0
        %2044 = vmatpush1.msra.mxu0 0.0
        %2045 = vmatprep.subr.mxu0 0.0
        %2046 = vmatpush1.msra.mxu0 0.0
        %2047 = vmatprep.subr.mxu0 0.0
        %2048 = vmatpush1.msra.mxu0 0.0
        %2049 = vmatprep.subr.mxu0 0.0
        %2050 = vmatpush1.msra.mxu0 0.0
        %2051 = vmatprep.subr.mxu0 0.0
        %2052 = vmatpush1.msra.mxu0 0.0
        %2053 = vmatprep.subr.mxu0 0.0
        %2054 = vmatpush1.msra.mxu0 0.0
        %2055 = vmatprep.subr.mxu0 0.0
        %2056 = vmatpush1.msra.mxu0 0.0
        %2057 = vmatprep.subr.mxu0 0.0
        %2058 = vmatpush1.msra.mxu0 0.0
        %2059 = vmatprep.subr.mxu0 0.0
        %2060 = vmatpush1.msra.mxu0 0.0
        %2061 = vmatprep.subr.mxu0 0.0
        %2062 = vmatpush1.msra.mxu0 0.0
        %2063 = vmatprep.subr.mxu0 0.0
        %2064 = vmatpush1.msra.mxu0 0.0
        %2065 = vmatprep.subr.mxu0 0.0
        %2066 = vmatpush1.msra.mxu0 0.0
        %2067 = vmatprep.subr.mxu0 0.0
        %2068 = vmatpush1.msra.mxu0 0.0
        %2069 = vmatprep.subr.mxu0 0.0
        %2070 = vmatpush1.msra.mxu0 0.0
        %2071 = vmatprep.subr.mxu0 0.0
        %2072 = vmatpush1.msra.mxu0 0.0
        %2073 = vmatprep.subr.mxu0 0.0
        %2074 = vmatpush1.msra.mxu0 0.0
        %2075 = vmatprep.subr.mxu0 0.0
        %2076 = vmatpush1.msra.mxu0 0.0
        %2077 = vmatprep.subr.mxu0 0.0
        %2078 = vmatpush1.msra.mxu0 0.0
        %2079 = vmatprep.subr.mxu0 0.0
        %2080 = vmatpush1.msra.mxu0 0.0
        %2081 = vmatprep.mubr.f32.mxu0 0.0
        %2082 = vmatmul.mubr.f32.gmra.mrb[0].mxu0 %v1802
        %v2083 = vpop.f32.mrb[0].mxu0
        %v2084 = vadd.f32 0.0, %v2083
        %v2085 = vpop.f32.mrb[0].mxu0
        %v2086 = vadd.f32 0.0, %v2085
        %2087 = vdwg.mxu0
        %v2089 = vsel %vm308, %v1800, 0
        %2091 = vmatprep.subr.mxu0 %v330
        %2092 = vmatpush1.msra.mxu0 %v329
        %2093 = vmatprep.subr.mxu0 %v338
        %2094 = vmatpush1.msra.mxu0 %v337
        %2095 = vmatprep.subr.mxu0 %v346
        %2096 = vmatpush1.msra.mxu0 %v345
        %2097 = vmatprep.subr.mxu0 %v354
        %2098 = vmatpush1.msra.mxu0 %v353
        %2099 = vmatprep.subr.mxu0 0.0
        %2100 = vmatpush1.msra.mxu0 0.0
        %2101 = vmatprep.subr.mxu0 0.0
        %2102 = vmatpush1.msra.mxu0 0.0
        %2103 = vmatprep.subr.mxu0 0.0
        %2104 = vmatpush1.msra.mxu0 0.0
        %2105 = vmatprep.subr.mxu0 0.0
        %2106 = vmatpush1.msra.mxu0 0.0
        %2107 = vmatprep.subr.mxu0 0.0
        %2108 = vmatpush1.msra.mxu0 0.0
        %2109 = vmatprep.subr.mxu0 0.0
        %2110 = vmatpush1.msra.mxu0 0.0
        %2111 = vmatprep.subr.mxu0 0.0
        %2112 = vmatpush1.msra.mxu0 0.0
        %2113 = vmatprep.subr.mxu0 0.0
        %2114 = vmatpush1.msra.mxu0 0.0
        %2115 = vmatprep.subr.mxu0 0.0
        %2116 = vmatpush1.msra.mxu0 0.0
        %2117 = vmatprep.subr.mxu0 0.0
        %2118 = vmatpush1.msra.mxu0 0.0
        %2119 = vmatprep.subr.mxu0 0.0
        %2120 = vmatpush1.msra.mxu0 0.0
        %2121 = vmatprep.subr.mxu0 0.0
        %2122 = vmatpush1.msra.mxu0 0.0
        %2123 = vmatprep.subr.mxu0 0.0
        %2124 = vmatpush1.msra.mxu0 0.0
        %2125 = vmatprep.subr.mxu0 0.0
        %2126 = vmatpush1.msra.mxu0 0.0
        %2127 = vmatprep.subr.mxu0 0.0
        %2128 = vmatpush1.msra.mxu0 0.0
        %2129 = vmatprep.subr.mxu0 0.0
        %2130 = vmatpush1.msra.mxu0 0.0
        %2131 = vmatprep.subr.mxu0 0.0
        %2132 = vmatpush1.msra.mxu0 0.0
        %2133 = vmatprep.subr.mxu0 0.0
        %2134 = vmatpush1.msra.mxu0 0.0
        %2135 = vmatprep.subr.mxu0 0.0
        %2136 = vmatpush1.msra.mxu0 0.0
        %2137 = vmatprep.subr.mxu0 0.0
        %2138 = vmatpush1.msra.mxu0 0.0
        %2139 = vmatprep.subr.mxu0 0.0
        %2140 = vmatpush1.msra.mxu0 0.0
        %2141 = vmatprep.subr.mxu0 0.0
        %2142 = vmatpush1.msra.mxu0 0.0
        %2143 = vmatprep.subr.mxu0 0.0
        %2144 = vmatpush1.msra.mxu0 0.0
        %2145 = vmatprep.subr.mxu0 0.0
        %2146 = vmatpush1.msra.mxu0 0.0
        %2147 = vmatprep.subr.mxu0 0.0
        %2148 = vmatpush1.msra.mxu0 0.0
        %2149 = vmatprep.subr.mxu0 0.0
        %2150 = vmatpush1.msra.mxu0 0.0
        %2151 = vmatprep.subr.mxu0 0.0
        %2152 = vmatpush1.msra.mxu0 0.0
        %2153 = vmatprep.subr.mxu0 0.0
        %2154 = vmatpush1.msra.mxu0 0.0
        %2155 = vmatprep.mubr.f32.mxu0 0.0
        %2156 = vmatmul.mubr.f32.gmra.mrb[0].mxu0 %v2089
        %v2157 = vpop.f32.mrb[0].mxu0
        %v2158 = vadd.f32 %v1871, %v2157
        %v2159 = vpop.f32.mrb[0].mxu0
        %v2160 = vadd.f32 %v1873, %v2159
        %2161 = vdwg.mxu0
        %2162 = vmatprep.subr.mxu0 %v332
        %2163 = vmatpush1.msra.mxu0 %v331
        %2164 = vmatprep.subr.mxu0 %v340
        %2165 = vmatpush1.msra.mxu0 %v339
        %2166 = vmatprep.subr.mxu0 %v348
        %2167 = vmatpush1.msra.mxu0 %v347
        %2168 = vmatprep.subr.mxu0 %v356
        %2169 = vmatpush1.msra.mxu0 %v355
        %2170 = vmatprep.subr.mxu0 0.0
        %2171 = vmatpush1.msra.mxu0 0.0
        %2172 = vmatprep.subr.mxu0 0.0
        %2173 = vmatpush1.msra.mxu0 0.0
        %2174 = vmatprep.subr.mxu0 0.0
        %2175 = vmatpush1.msra.mxu0 0.0
        %2176 = vmatprep.subr.mxu0 0.0
        %2177 = vmatpush1.msra.mxu0 0.0
        %2178 = vmatprep.subr.mxu0 0.0
        %2179 = vmatpush1.msra.mxu0 0.0
        %2180 = vmatprep.subr.mxu0 0.0
        %2181 = vmatpush1.msra.mxu0 0.0
        %2182 = vmatprep.subr.mxu0 0.0
        %2183 = vmatpush1.msra.mxu0 0.0
        %2184 = vmatprep.subr.mxu0 0.0
        %2185 = vmatpush1.msra.mxu0 0.0
        %2186 = vmatprep.subr.mxu0 0.0
        %2187 = vmatpush1.msra.mxu0 0.0
        %2188 = vmatprep.subr.mxu0 0.0
        %2189 = vmatpush1.msra.mxu0 0.0
        %2190 = vmatprep.subr.mxu0 0.0
        %2191 = vmatpush1.msra.mxu0 0.0
        %2192 = vmatprep.subr.mxu0 0.0
        %2193 = vmatpush1.msra.mxu0 0.0
        %2194 = vmatprep.subr.mxu0 0.0
        %2195 = vmatpush1.msra.mxu0 0.0
        %2196 = vmatprep.subr.mxu0 0.0
        %2197 = vmatpush1.msra.mxu0 0.0
        %2198 = vmatprep.subr.mxu0 0.0
        %2199 = vmatpush1.msra.mxu0 0.0
        %2200 = vmatprep.subr.mxu0 0.0
        %2201 = vmatpush1.msra.mxu0 0.0
        %2202 = vmatprep.subr.mxu0 0.0
        %2203 = vmatpush1.msra.mxu0 0.0
        %2204 = vmatprep.subr.mxu0 0.0
        %2205 = vmatpush1.msra.mxu0 0.0
        %2206 = vmatprep.subr.mxu0 0.0
        %2207 = vmatpush1.msra.mxu0 0.0
        %2208 = vmatprep.subr.mxu0 0.0
        %2209 = vmatpush1.msra.mxu0 0.0
        %2210 = vmatprep.subr.mxu0 0.0
        %2211 = vmatpush1.msra.mxu0 0.0
        %2212 = vmatprep.subr.mxu0 0.0
        %2213 = vmatpush1.msra.mxu0 0.0
        %2214 = vmatprep.subr.mxu0 0.0
        %2215 = vmatpush1.msra.mxu0 0.0
        %2216 = vmatprep.subr.mxu0 0.0
        %2217 = vmatpush1.msra.mxu0 0.0
        %2218 = vmatprep.subr.mxu0 0.0
        %2219 = vmatpush1.msra.mxu0 0.0
        %2220 = vmatprep.subr.mxu0 0.0
        %2221 = vmatpush1.msra.mxu0 0.0
        %2222 = vmatprep.subr.mxu0 0.0
        %2223 = vmatpush1.msra.mxu0 0.0
        %2224 = vmatprep.subr.mxu0 0.0
        %2225 = vmatpush1.msra.mxu0 0.0
        %2226 = vmatprep.mubr.f32.mxu0 0.0
        %2227 = vmatmul.mubr.f32.gmra.mrb[0].mxu0 %v2089
        %v2228 = vpop.f32.mrb[0].mxu0
        %v2229 = vadd.f32 %v1942, %v2228
        %v2230 = vpop.f32.mrb[0].mxu0
        %v2231 = vadd.f32 %v1944, %v2230
        %2232 = vdwg.mxu0
        %2233 = vmatprep.subr.mxu0 %v334
        %2234 = vmatpush1.msra.mxu0 %v333
        %2235 = vmatprep.subr.mxu0 %v342
        %2236 = vmatpush1.msra.mxu0 %v341
        %2237 = vmatprep.subr.mxu0 %v350
        %2238 = vmatpush1.msra.mxu0 %v349
        %2239 = vmatprep.subr.mxu0 %v358
        %2240 = vmatpush1.msra.mxu0 %v357
        %2241 = vmatprep.subr.mxu0 0.0
        %2242 = vmatpush1.msra.mxu0 0.0
        %2243 = vmatprep.subr.mxu0 0.0
        %2244 = vmatpush1.msra.mxu0 0.0
        %2245 = vmatprep.subr.mxu0 0.0
        %2246 = vmatpush1.msra.mxu0 0.0
        %2247 = vmatprep.subr.mxu0 0.0
        %2248 = vmatpush1.msra.mxu0 0.0
        %2249 = vmatprep.subr.mxu0 0.0
        %2250 = vmatpush1.msra.mxu0 0.0
        %2251 = vmatprep.subr.mxu0 0.0
        %2252 = vmatpush1.msra.mxu0 0.0
        %2253 = vmatprep.subr.mxu0 0.0
        %2254 = vmatpush1.msra.mxu0 0.0
        %2255 = vmatprep.subr.mxu0 0.0
        %2256 = vmatpush1.msra.mxu0 0.0
        %2257 = vmatprep.subr.mxu0 0.0
        %2258 = vmatpush1.msra.mxu0 0.0
        %2259 = vmatprep.subr.mxu0 0.0
        %2260 = vmatpush1.msra.mxu0 0.0
        %2261 = vmatprep.subr.mxu0 0.0
        %2262 = vmatpush1.msra.mxu0 0.0
        %2263 = vmatprep.subr.mxu0 0.0
        %2264 = vmatpush1.msra.mxu0 0.0
        %2265 = vmatprep.subr.mxu0 0.0
        %2266 = vmatpush1.msra.mxu0 0.0
        %2267 = vmatprep.subr.mxu0 0.0
        %2268 = vmatpush1.msra.mxu0 0.0
        %2269 = vmatprep.subr.mxu0 0.0
        %2270 = vmatpush1.msra.mxu0 0.0
        %2271 = vmatprep.subr.mxu0 0.0
        %2272 = vmatpush1.msra.mxu0 0.0
        %2273 = vmatprep.subr.mxu0 0.0
        %2274 = vmatpush1.msra.mxu0 0.0
        %2275 = vmatprep.subr.mxu0 0.0
        %2276 = vmatpush1.msra.mxu0 0.0
        %2277 = vmatprep.subr.mxu0 0.0
        %2278 = vmatpush1.msra.mxu0 0.0
        %2279 = vmatprep.subr.mxu0 0.0
        %2280 = vmatpush1.msra.mxu0 0.0
        %2281 = vmatprep.subr.mxu0 0.0
        %2282 = vmatpush1.msra.mxu0 0.0
        %2283 = vmatprep.subr.mxu0 0.0
        %2284 = vmatpush1.msra.mxu0 0.0
        %2285 = vmatprep.subr.mxu0 0.0
        %2286 = vmatpush1.msra.mxu0 0.0
        %2287 = vmatprep.subr.mxu0 0.0
        %2288 = vmatpush1.msra.mxu0 0.0
        %2289 = vmatprep.subr.mxu0 0.0
        %2290 = vmatpush1.msra.mxu0 0.0
        %2291 = vmatprep.subr.mxu0 0.0
        %2292 = vmatpush1.msra.mxu0 0.0
        %2293 = vmatprep.subr.mxu0 0.0
        %2294 = vmatpush1.msra.mxu0 0.0
        %2295 = vmatprep.subr.mxu0 0.0
        %2296 = vmatpush1.msra.mxu0 0.0
        %2297 = vmatprep.mubr.f32.mxu0 0.0
        %2298 = vmatmul.mubr.f32.gmra.mrb[0].mxu0 %v2089
        %v2299 = vpop.f32.mrb[0].mxu0
        %v2300 = vadd.f32 %v2013, %v2299
        %v2301 = vpop.f32.mrb[0].mxu0
        %v2302 = vadd.f32 %v2015, %v2301
        %2303 = vdwg.mxu0
        %2304 = vmatprep.subr.mxu0 %v336
        %2305 = vmatpush1.msra.mxu0 %v335
        %2306 = vmatprep.subr.mxu0 %v344
        %2307 = vmatpush1.msra.mxu0 %v343
        %2308 = vmatprep.subr.mxu0 %v352
        %2309 = vmatpush1.msra.mxu0 %v351
        %2310 = vmatprep.subr.mxu0 %v360
        %2311 = vmatpush1.msra.mxu0 %v359
        %2312 = vmatprep.subr.mxu0 0.0
        %2313 = vmatpush1.msra.mxu0 0.0
        %2314 = vmatprep.subr.mxu0 0.0
        %2315 = vmatpush1.msra.mxu0 0.0
        %2316 = vmatprep.subr.mxu0 0.0
        %2317 = vmatpush1.msra.mxu0 0.0
        %2318 = vmatprep.subr.mxu0 0.0
        %2319 = vmatpush1.msra.mxu0 0.0
        %2320 = vmatprep.subr.mxu0 0.0
        %2321 = vmatpush1.msra.mxu0 0.0
        %2322 = vmatprep.subr.mxu0 0.0
        %2323 = vmatpush1.msra.mxu0 0.0
        %2324 = vmatprep.subr.mxu0 0.0
        %2325 = vmatpush1.msra.mxu0 0.0
        %2326 = vmatprep.subr.mxu0 0.0
        %2327 = vmatpush1.msra.mxu0 0.0
        %2328 = vmatprep.subr.mxu0 0.0
        %2329 = vmatpush1.msra.mxu0 0.0
        %2330 = vmatprep.subr.mxu0 0.0
        %2331 = vmatpush1.msra.mxu0 0.0
        %2332 = vmatprep.subr.mxu0 0.0
        %2333 = vmatpush1.msra.mxu0 0.0
        %2334 = vmatprep.subr.mxu0 0.0
        %2335 = vmatpush1.msra.mxu0 0.0
        %2336 = vmatprep.subr.mxu0 0.0
        %2337 = vmatpush1.msra.mxu0 0.0
        %2338 = vmatprep.subr.mxu0 0.0
        %2339 = vmatpush1.msra.mxu0 0.0
        %2340 = vmatprep.subr.mxu0 0.0
        %2341 = vmatpush1.msra.mxu0 0.0
        %2342 = vmatprep.subr.mxu0 0.0
        %2343 = vmatpush1.msra.mxu0 0.0
        %2344 = vmatprep.subr.mxu0 0.0
        %2345 = vmatpush1.msra.mxu0 0.0
        %2346 = vmatprep.subr.mxu0 0.0
        %2347 = vmatpush1.msra.mxu0 0.0
        %2348 = vmatprep.subr.mxu0 0.0
        %2349 = vmatpush1.msra.mxu0 0.0
        %2350 = vmatprep.subr.mxu0 0.0
        %2351 = vmatpush1.msra.mxu0 0.0
        %2352 = vmatprep.subr.mxu0 0.0
        %2353 = vmatpush1.msra.mxu0 0.0
        %2354 = vmatprep.subr.mxu0 0.0
        %2355 = vmatpush1.msra.mxu0 0.0
        %2356 = vmatprep.subr.mxu0 0.0
        %2357 = vmatpush1.msra.mxu0 0.0
        %2358 = vmatprep.subr.mxu0 0.0
        %2359 = vmatpush1.msra.mxu0 0.0
        %2360 = vmatprep.subr.mxu0 0.0
        %2361 = vmatpush1.msra.mxu0 0.0
        %2362 = vmatprep.subr.mxu0 0.0
        %2363 = vmatpush1.msra.mxu0 0.0
        %2364 = vmatprep.subr.mxu0 0.0
        %2365 = vmatpush1.msra.mxu0 0.0
        %2366 = vmatprep.subr.mxu0 0.0
        %2367 = vmatpush1.msra.mxu0 0.0
        %2368 = vmatprep.mubr.f32.mxu0 0.0
        %2369 = vmatmul.mubr.f32.gmra.mrb[0].mxu0 %v2089
        %v2370 = vpop.f32.mrb[0].mxu0
        %v2371 = vadd.f32 %v2084, %v2370
        %v2372 = vpop.f32.mrb[0].mxu0
        %v2373 = vadd.f32 %v2086, %v2372
        %2374 = vdwg.mxu0
        %v2375 = vsub.f32 %v321, %v2158
        %v2376 = vsub.f32 %v322, %v2160
        %v2377 = vsub.f32 %v323, %v2229
        %v2378 = vsub.f32 %v324, %v2231
        %v2379 = vsub.f32 %v325, %v2300
        %v2380 = vsub.f32 %v326, %v2302
        %v2381 = vsub.f32 %v327, %v2371
        %v2382 = vsub.f32 %v328, %v2373
        %v2383 = vmul.f32 %v463, %v747
        %v2384 = vmul.f32 %v465, %v749
        %v2385 = vmul.f32 %v534, %v818
        %v2386 = vmul.f32 %v536, %v820
        %v2387 = vmul.f32 %v605, %v889
        %v2388 = vmul.f32 %v607, %v891
        %v2389 = vmul.f32 %v676, %v960
        %v2390 = vmul.f32 %v678, %v962
        %v2391 = vmul.f32 %v2375, %v2383
        %v2392 = vmul.f32 %v2376, %v2384
        %v2393 = vmul.f32 %v2377, %v2385
        %v2394 = vmul.f32 %v2378, %v2386
        %v2395 = vmul.f32 %v2379, %v2387
        %v2396 = vmul.f32 %v2380, %v2388
        %v2397 = vmul.f32 %v2381, %v2389
        %v2398 = vmul.f32 %v2382, %v2390
        %2399 = vst [vmem:[%s306] sm:$0xff] %v2391
        %2400 = vst [vmem:[%s306 + $0x8] sm:$0xff] %v2392
        %2401 = vst [vmem:[%s306 + $0x10] sm:$0xff] %v2393
        %2402 = vst [vmem:[%s306 + $0x18] sm:$0xff] %v2394
        %2403 = vst [vmem:[%s306 + $0x20] sm:$0xff] %v2395
        %2404 = vst [vmem:[%s306 + $0x28] sm:$0xff] %v2396
        %2405 = vst [vmem:[%s306 + $0x30] sm:$0xff] %v2397
        %2406 = vst [vmem:[%s306 + $0x38] sm:$0xff] %v2398
        %s2407 = sand.u32 %s166, 1
        %s2408 = scalar_lea.sflag [#allocation3], %s2407
        %s2409 = sand.u32 %s166, 1
        %s2410 = smul.addr %s2409, 8
        %s2411 = scalar_lea.vmem [#allocation2], %s2410
        %p2412 = scmp.lt.s32.totalorder %s22, 1
        %s2413 = scalar_select %p2412, %s22, 1
        %s2414 = smul.addr %s2413, 8
        %s2415 = smul.addr %s2414, 8
        %s2416 = scalar_lea.vmem %s7, %s2415
        // Predicated region
        $region45: #{vdp_softmax.1} parent=43 // pred_check
          %p2417 = pneg %p176
        $region46: #{vdp_softmax.1} parent=43 // pred_check_branch
          %2419 = sbr.rel (%p2417) target = $region48
        $region47: #{vdp_softmax.1} parent=43 // pred_region
          %s2421 = ssub.s32 128, 128
          %2422 = vsyncadd %s2408, %s2421
          %s2423 = smul.addr %s22, 128
          %s2424 = scalar_lea.hbm %s6, %s2423
          %s2426 = sshll.u32 %s2411, 4
          %s2427 = int_to_ptr.vmem [resolvable:$true] %s2426
          %2429 = dma.vmem_to_hbm [thread:$0]  %s2427, 128, %s2424, %s2408
        $region48: #{vdp_softmax.1} parent=43 // pred_fallthru
          _
        // Predicated region
        $region49: #{vdp_softmax.1} parent=43 // pred_check
          %p2430 = pneg %p202
        $region50: #{vdp_softmax.1} parent=43 // pred_check_branch
          %2432 = sbr.rel (%p2430) target = $region52
        $region51: #{vdp_softmax.1} parent=43 // pred_region
          _
        $region52: #{vdp_softmax.1} parent=43 // pred_fallthru
          _
      $region44: #{vdp_softmax.1} parent=5 // pred_fallthru
        _
      %p2433 = scmp.le.s32.totalorder 2, %s17
      // Predicated region
      $region53: #{vdp_softmax.1} parent=5 // pred_check
        %p2434 = pneg %p2433
      $region54: #{vdp_softmax.1} parent=5 // pred_check_branch
        %2436 = sbr.rel (%p2434) target = $region56
      $region55: #{vdp_softmax.1} parent=5 // pred_region
        %s2437 = ssub.s32 %s17, 2
        // Predicated region
        $region57: #{vdp_softmax.1} parent=55 // pred_check
          %p2438 = pneg %p182
        $region58: #{vdp_softmax.1} parent=55 // pred_check_branch
          %2440 = sbr.rel (%p2438) target = $region60
        $region59: #{vdp_softmax.1} parent=55 // pred_region
          %s2441 = sand.u32 %s167, 1
          %s2442 = scalar_lea.sflag [#allocation3], %s2441
          %s2443 = sand.u32 %s167, 1
          %s2444 = smul.addr %s2443, 8
          %s2445 = scalar_lea.vmem [#allocation2], %s2444
          %2446 = dma.done %s2442, 128
        $region60: #{vdp_softmax.1} parent=55 // pred_fallthru
          _
        // Predicated region
        $region61: #{vdp_softmax.1} parent=55 // pred_check
          %p2447 = pneg %p208
        $region62: #{vdp_softmax.1} parent=55 // pred_check_branch
          %2449 = sbr.rel (%p2447) target = $region64
        $region63: #{vdp_softmax.1} parent=55 // pred_region
          %p2450 = scmp.lt.s32.totalorder %s23, 1
          %s2451 = scalar_select %p2450, %s23, 1
          %s2452 = smul.addr %s2451, 8
          %s2453 = smul.addr %s2452, 8
          %s2454 = scalar_lea.vmem %s7, %s2453
        $region64: #{vdp_softmax.1} parent=55 // pred_fallthru
          _
      $region56: #{vdp_softmax.1} parent=5 // pred_fallthru
        _
    $region6: #{vdp_softmax.1} parent=1 // loop_footer
      %s21 = sadd.s32 1, %s17
    $region7: #{vdp_softmax.1} parent=1 // loop_footer_branch
      %16 = sbr.rel target = $region3
    $region8: #{vdp_softmax.1} parent=1 // loop_exit
      _
    %2455 = vsyncpa [#allocation3], 1
    %s2456 = scalar_lea.sflag [#allocation3], 1
    %2457 = vsyncpa %s2456, 1

</llo_original>
